<compile_context>
chip_gen: v7x
topology: tpu7x:2x2x1
jax: 0.10.0
libtpu: 0.0.40
codegen_flags: <defaults>
</compile_context>

<pallas_src>
import functools

import jax
import jax.numpy as jnp
from jax import lax
from jax.experimental import pallas as pl
from jax.experimental.pallas import tpu as pltpu


def _round8(x):
    return (x + 7) // 8 * 8


# ----------------------------------------------------------------------------
# Host-side parameter packing: one contiguous f32 slab, 8-row aligned pieces.
# ----------------------------------------------------------------------------
def pack_retain_params(emb_pad, p, *, emb_size, out_len, out_pad):
    E = emb_size
    width = 6 * E
    assert out_pad <= width

    def gate_split(w):                       # (E, 3E) -> [r, z, n], each (E, E)
        return [w[:, g * E:(g + 1) * E] for g in range(3)]

    # input->hidden weights for both GRUs, column order [a_r a_z a_n b_r b_z b_n]
    wih_all = jnp.concatenate([p["wih_a"], p["wih_b"]], axis=1)           # (E, 6E)
    # per-gate recurrent weights stacked along rows (same order)
    whh_all = jnp.concatenate(gate_split(p["whh_a"]) + gate_split(p["whh_b"]),
                              axis=0)                                     # (6E, E)
    # hoisted bias: bih per gate, plus bhh folded in for r/z (n's bhh is
    # multiplied by r inside the cell and must stay separate).
    bi_all = jnp.concatenate([
        p["bih_a"][:, 0:E] + p["bhh_a"][:, 0:E],
        p["bih_a"][:, E:2 * E] + p["bhh_a"][:, E:2 * E],
        p["bih_a"][:, 2 * E:3 * E],
        p["bih_b"][:, 0:E] + p["bhh_b"][:, 0:E],
        p["bih_b"][:, E:2 * E] + p["bhh_b"][:, E:2 * E],
        p["bih_b"][:, 2 * E:3 * E],
    ], axis=1)                                                            # (1, 6E)

    wo_pad = jnp.pad(p["wo"], ((0, 0), (0, out_pad - out_len)))           # (E, 128)
    bo_pad = jnp.pad(p["bo"], ((0, 0), (0, out_pad - out_len)))           # (1, 128)

    pieces = [
        ("emb", emb_pad),                                # (K, E)
        ("wih", wih_all),                                # (E, 6E)
        ("whh", whh_all),                                # (6E, E)
        ("wb", p["wb"]),                                 # (E, E)
        ("wo", wo_pad),                                  # (E, out_pad)
        ("bi", bi_all),                                  # (1, 6E)
        ("bhh_an", p["bhh_a"][:, 2 * E:3 * E]),          # (1, E)
        ("bhh_bn", p["bhh_b"][:, 2 * E:3 * E]),          # (1, E)
        ("bb", p["bb"]),                                 # (1, E)
        ("bo", bo_pad),                                  # (1, out_pad)
    ]

    offs, rows, r = {}, [], 0
    for name, a in pieces:
        r8 = _round8(r)
        if r8 > r:
            rows.append(jnp.zeros((r8 - r, width), jnp.float32))
            r = r8
        offs[name] = r
        rows.append(jnp.pad(a.astype(jnp.float32),
                            ((0, 0), (0, width - a.shape[1]))))
        r += a.shape[0]
    r8 = _round8(r)
    if r8 > r:
        rows.append(jnp.zeros((r8 - r, width), jnp.float32))
    slab = jnp.concatenate(rows, axis=0)                                  # (rows, 6E)
    return slab, offs


# ----------------------------------------------------------------------------
# Pallas kernel: one patient per grid step.
# ----------------------------------------------------------------------------
def retain_kernel(counts_ref, params_ref, out_ref, hb_ref, *, V, E, K, OUTP, offs):
    W = params_ref

    # One-time static slices of the single parameter slab (off the critical path).
    emb = W[offs["emb"]:offs["emb"] + K, 0:E]                      # (K, E)
    wih = W[offs["wih"]:offs["wih"] + E, 0:6 * E]                  # (E, 6E)
    whh = [W[offs["whh"] + g * E: offs["whh"] + (g + 1) * E, 0:E]  # 6 x (E, E)
           for g in range(6)]
    wb = W[offs["wb"]:offs["wb"] + E, 0:E]                         # (E, E)
    wo = W[offs["wo"]:offs["wo"] + E, 0:OUTP]                      # (E, OUTP)
    bi = W[offs["bi"]:offs["bi"] + 1, 0:6 * E]                     # (1, 6E)
    bhh_an = W[offs["bhh_an"]:offs["bhh_an"] + 1, 0:E]             # (1, E)
    bhh_bn = W[offs["bhh_bn"]:offs["bhh_bn"] + 1, 0:E]             # (1, E)
    bb = W[offs["bb"]:offs["bb"] + 1, 0:E]                         # (1, E)
    bo = W[offs["bo"]:offs["bo"] + 1, 0:OUTP]                      # (1, OUTP)

    counts = counts_ref[0]                                         # (V, K)

    # embedding lookup + sum over codes within a visit  == counts @ table
    ve = jnp.dot(counts, emb, preferred_element_type=jnp.float32)  # (V, E)

    # Hoisted input->hidden projections for BOTH GRUs (+ folded r/z biases):
    # one MXU call instead of 2*V tiny matmuls inside the recurrence.
    gi = jnp.dot(ve, wih, preferred_element_type=jnp.float32) + bi  # (V, 6E)
    gi_ar, gi_az, gi_an = gi[:, 0:E], gi[:, E:2 * E], gi[:, 2 * E:3 * E]
    gi_br, gi_bz, gi_bn = gi[:, 3 * E:4 * E], gi[:, 4 * E:5 * E], gi[:, 5 * E:6 * E]

    # Fused alpha+beta GRU recurrence, fully unrolled (V is static & tiny).
    # Per-gate (E,E) weights keep r/z/n in separate vregs (no lane shuffles).
    h_a = jnp.zeros((1, E), jnp.float32)
    h_b = jnp.zeros((1, E), jnp.float32)
    for t in range(V):
        gha_r = jnp.dot(h_a, whh[0], preferred_element_type=jnp.float32)
        gha_z = jnp.dot(h_a, whh[1], preferred_element_type=jnp.float32)
        gha_n = jnp.dot(h_a, whh[2], preferred_element_type=jnp.float32)
        ghb_r = jnp.dot(h_b, whh[3], preferred_element_type=jnp.float32)
        ghb_z = jnp.dot(h_b, whh[4], preferred_element_type=jnp.float32)
        ghb_n = jnp.dot(h_b, whh[5], preferred_element_type=jnp.float32)

        # alpha GRU (only consumer was the degenerate attn_g == 1; kept for
        # structural faithfulness — compiler may DCE it).
        r_a = jax.nn.sigmoid(gi_ar[t:t + 1, :] + gha_r)
        z_a = jax.nn.sigmoid(gi_az[t:t + 1, :] + gha_z)
        n_a = jnp.tanh(gi_an[t:t + 1, :] + r_a * (gha_n + bhh_an))
        h_a = (1.0 - z_a) * n_a + z_a * h_a

        # beta GRU
        r_b = jax.nn.sigmoid(gi_br[t:t + 1, :] + ghb_r)
        z_b = jax.nn.sigmoid(gi_bz[t:t + 1, :] + ghb_z)
        n_b = jnp.tanh(gi_bn[t:t + 1, :] + r_b * (ghb_n + bhh_bn))
        h_b = (1.0 - z_b) * n_b + z_b * h_b

        hb_ref[t:t + 1, :] = h_b

    h_all = hb_ref[...]                                            # (V, E)

    # attn_g = softmax over a size-1 axis == 1.0 exactly -> elided.
    attn_h = jnp.tanh(jnp.dot(h_all, wb, preferred_element_type=jnp.float32) + bb)
    c_sum = jnp.sum(attn_h * ve, axis=0, keepdims=True)            # (1, E)
    out_ref[0] = jnp.dot(c_sum, wo, preferred_element_type=jnp.float32) + bo


# ----------------------------------------------------------------------------
# Wrapper
# ----------------------------------------------------------------------------
def retain_forward(counts, params_slab, offs, *, out_len, out_pad=128):
    B, V, K = counts.shape
    E = params_slab.shape[1] // 6
    kernel = functools.partial(retain_kernel, V=V, E=E, K=K, OUTP=out_pad, offs=offs)
    out = pl.pallas_call(
        kernel,
        out_shape=jax.ShapeDtypeStruct((B, 1, out_pad), jnp.float32),
        grid=(B,),
        in_specs=[
            pl.BlockSpec((1, V, K), lambda b: (b, 0, 0)),          # per-patient counts
            pl.BlockSpec(params_slab.shape, lambda b: (0, 0)),     # resident params
        ],
        out_specs=pl.BlockSpec((1, 1, out_pad), lambda b: (b, 0, 0)),
        scratch_shapes=[pltpu.VMEM((V, E), jnp.float32)],          # beta hidden states
        compiler_params=pltpu.CompilerParams(
            dimension_semantics=("parallel",)),                    # v7x: 2 TCs split patients
    )(counts, params_slab)
    return out[:, 0, :out_len]                                     # (B, out_len)


# ----------------------------------------------------------------------------
# Pure-JAX reference (faithful math, incl. alpha GRU + size-1 softmax)
# ----------------------------------------------------------------------------
def retain_reference(counts_b, emb_pad, p):
    E = emb_pad.shape[1]

    def single(counts):
        ve = counts @ emb_pad

        def gru(wih, whh, bih, bhh):
            def step(h, x):
                gi = x[None, :] @ wih + bih
                gh = h @ whh + bhh
                r = jax.nn.sigmoid(gi[:, :E] + gh[:, :E])
                z = jax.nn.sigmoid(gi[:, E:2 * E] + gh[:, E:2 * E])
                n = jnp.tanh(gi[:, 2 * E:] + r * gh[:, 2 * E:])
                h_new = (1.0 - z) * n + z * h
                return h_new, h_new[0]

            _, hs = lax.scan(step, jnp.zeros((1, E), jnp.float32), ve)
            return hs

        g = gru(p["wih_a"], p["whh_a"], p["bih_a"], p["bhh_a"])
        h = gru(p["wih_b"], p["whh_b"], p["bih_b"], p["bhh_b"])
        attn_g = jax.nn.softmax(
            jnp.sum(g * p["wa"], axis=-1, keepdims=True) + p["ba"], axis=-1)
        attn_h = jnp.tanh(h @ p["wb"] + p["bb"])
        c = jnp.sum(attn_g * attn_h * ve, axis=0, keepdims=True)
        return (c @ p["wo"] + p["bo"])[0]

    return jax.vmap(single)(counts_b)


# ----------------------------------------------------------------------------
# Main
# ----------------------------------------------------------------------------
if __name__ == "__main__":
    voc_size = (10, 12, 8)        # (diag, proc, med) vocab sizes
    emb_size = 32
    num_visits = 6
    batch = 4                     # patients (grid axis)
    input_len = sum(voc_size)     # 30 ; padding index == input_len
    output_len = voc_size[2]      # 8
    OUT_PAD = 128                 # lane-dense output slab
    K_PAD = _round8(input_len + 1)  # 31 -> 32

    key = jax.random.PRNGKey(0)
    keys = jax.random.split(key, 24)

    # synthetic patients: per-visit code indices -> multi-hot count matrices
    n_diag, n_proc, n_med = 4, 3, 3
    diag = jax.random.randint(keys[0], (batch, num_visits, n_diag), 0, voc_size[0])
    proc = jax.random.randint(keys[1], (batch, num_visits, n_proc), 0, voc_size[1]) + voc_size[0]
    med = jax.random.randint(keys[2], (batch, num_visits, n_med), 0, voc_size[2]) \
        + voc_size[0] + voc_size[1]
    idx = jnp.concatenate([diag, proc, med], axis=2)                       # (B, V, codes)
    counts = jax.nn.one_hot(idx, input_len + 1, dtype=jnp.float32).sum(axis=2)  # (B, V, 31)
    counts = jnp.pad(counts, ((0, 0), (0, 0), (0, K_PAD - (input_len + 1))))    # (B, V, 32)

    # deterministic parameter init (PyTorch-like uniform(-1/sqrt(E), 1/sqrt(E)))
    bound = 1.0 / float(emb_size) ** 0.5

    def u(k, shape):
        return jax.random.uniform(k, shape, jnp.float32, -bound, bound)

    emb_table = jax.random.normal(keys[3], (input_len + 1, emb_size), jnp.float32)
    emb_table = emb_table.at[input_len].set(0.0)      # padding_idx row is zero
    emb_pad = jnp.pad(emb_table, ((0, K_PAD - (input_len + 1)), (0, 0)))   # (32, 32)

    E = emb_size
    params = dict(
        # alpha GRU (gate order [r, z, n], pre-transposed to (in, out))
        wih_a=u(keys[4], (E, 3 * E)), whh_a=u(keys[5], (E, 3 * E)),
        bih_a=u(keys[6], (1, 3 * E)), bhh_a=u(keys[7], (1, 3 * E)),
        # beta GRU
        wih_b=u(keys[8], (E, 3 * E)), whh_b=u(keys[9], (E, 3 * E)),
        bih_b=u(keys[10], (1, 3 * E)), bhh_b=u(keys[11], (1, 3 * E)),
        # alpha_li: Linear(E, 1) (only used by the reference; attn_g == 1)
        wa=u(keys[12], (1, E)), ba=u(keys[13], (1, 1)),
        # beta_li: Linear(E, E)
        wb=u(keys[14], (E, E)), bb=u(keys[15], (1, E)),
        # output: Linear(E, output_len)
        wo=u(keys[16], (E, output_len)), bo=u(keys[17], (1, output_len)),
    )

    slab, offs = pack_retain_params(emb_pad, params, emb_size=emb_size,
                                    out_len=output_len, out_pad=OUT_PAD)

    out = retain_forward(counts, slab, offs, out_len=output_len, out_pad=OUT_PAD)
    out = jax.block_until_ready(out)

    ref = retain_reference(counts, emb_pad, params)
    assert out.shape == (batch, output_len)
    assert jnp.allclose(out, ref, rtol=1e-3, atol=1e-3), (out, ref)

    print("KERNEL_OK")
</pallas_src>

<mosaic_0001>
module attributes {stable_mosaic.version = 11 : i64} {
  func.func @retain_kernel(%arg0: i32, %arg1: memref<1x6x32xf32, #tpu.memory_space<vmem>>, %arg2: memref<360x192xf32, #tpu.memory_space<vmem>>, %arg3: memref<1x1x128xf32, #tpu.memory_space<vmem>>, %arg4: memref<6x32xf32, #tpu.memory_space<vmem>>) attributes {dimension_semantics = [#tpu.dimension_semantics<parallel>], iteration_bounds = array<i64: 4>, scalar_prefetch = 0 : i64, scratch_operands = 1 : i64, tpu.core_type = #tpu.core_type<tc>, window_params = [{transform_indices = @transform_0, window_bounds = array<i64: 1, 6, 32>}, {pipeline_mode = #tpu.pipeline_mode<synchronous>, transform_indices = @transform_1, window_bounds = array<i64: 360, 192>}, {transform_indices = @transform_2, window_bounds = array<i64: 1, 1, 128>}]} {
    %c0 = arith.constant 0 : index
    %c0_0 = arith.constant 0 : index
    %0 = vector.load %arg2[%c0, %c0_0] : memref<360x192xf32, #tpu.memory_space<vmem>>, vector<32x32xf32>
    %c32 = arith.constant 32 : index
    %c0_1 = arith.constant 0 : index
    %1 = vector.load %arg2[%c32, %c0_1] : memref<360x192xf32, #tpu.memory_space<vmem>>, vector<32x192xf32>
    %c160 = arith.constant 160 : index
    %c0_2 = arith.constant 0 : index
    %2 = vector.load %arg2[%c160, %c0_2] : memref<360x192xf32, #tpu.memory_space<vmem>>, vector<32x32xf32>
    %c192 = arith.constant 192 : index
    %c0_3 = arith.constant 0 : index
    %3 = vector.load %arg2[%c192, %c0_3] : memref<360x192xf32, #tpu.memory_space<vmem>>, vector<32x32xf32>
    %c224 = arith.constant 224 : index
    %c0_4 = arith.constant 0 : index
    %4 = vector.load %arg2[%c224, %c0_4] : memref<360x192xf32, #tpu.memory_space<vmem>>, vector<32x32xf32>
    %c256 = arith.constant 256 : index
    %c0_5 = arith.constant 0 : index
    %5 = vector.load %arg2[%c256, %c0_5] : memref<360x192xf32, #tpu.memory_space<vmem>>, vector<32x32xf32>
    %c288 = arith.constant 288 : index
    %c0_6 = arith.constant 0 : index
    %6 = vector.load %arg2[%c288, %c0_6] : memref<360x192xf32, #tpu.memory_space<vmem>>, vector<32x128xf32>
    %c320 = arith.constant 320 : index
    %c0_7 = arith.constant 0 : index
    %7 = vector.load %arg2[%c320, %c0_7] : memref<360x192xf32, #tpu.memory_space<vmem>>, vector<1x192xf32>
    %c336 = arith.constant 336 : index
    %c0_8 = arith.constant 0 : index
    %8 = vector.load %arg2[%c336, %c0_8] : memref<360x192xf32, #tpu.memory_space<vmem>>, vector<1x32xf32>
    %c344 = arith.constant 344 : index
    %c0_9 = arith.constant 0 : index
    %9 = vector.load %arg2[%c344, %c0_9] : memref<360x192xf32, #tpu.memory_space<vmem>>, vector<1x32xf32>
    %c352 = arith.constant 352 : index
    %c0_10 = arith.constant 0 : index
    %10 = vector.load %arg2[%c352, %c0_10] : memref<360x192xf32, #tpu.memory_space<vmem>>, vector<1x128xf32>
    %c0_11 = arith.constant 0 : index
    %c0_12 = arith.constant 0 : index
    %c0_13 = arith.constant 0 : index
    %11 = vector.load %arg1[%c0_11, %c0_12, %c0_13] : memref<1x6x32xf32, #tpu.memory_space<vmem>>, vector<1x6x32xf32>
    %12 = vector.shape_cast %11 : vector<1x6x32xf32> to vector<6x32xf32>
    %cst = arith.constant dense<0.000000e+00> : vector<6x32xf32>
    %13 = tpu.matmul %12, %0, %cst {dimension_numbers = #tpu.dot_dimension_numbers<[1], [0], [0], [1], [0, 0, 1, 1], [], []>} : vector<6x32xf32>, vector<32x32xf32>, vector<6x32xf32> -> vector<6x32xf32>
    %cst_14 = arith.constant dense<0.000000e+00> : vector<6x192xf32>
    %14 = tpu.matmul %13, %1, %cst_14 {dimension_numbers = #tpu.dot_dimension_numbers<[1], [0], [0], [1], [0, 0, 1, 1], [], []>} : vector<6x32xf32>, vector<32x192xf32>, vector<6x192xf32> -> vector<6x192xf32>
    %15 = vector.broadcast %7 : vector<1x192xf32> to vector<6x192xf32>
    %16 = arith.addf %14, %15 : vector<6x192xf32>
    %17 = vector.extract_strided_slice %16 {offsets = [0, 96], sizes = [6, 32], strides = [1, 1]} : vector<6x192xf32> to vector<6x32xf32>
    %18 = vector.extract_strided_slice %16 {offsets = [0, 128], sizes = [6, 32], strides = [1, 1]} : vector<6x192xf32> to vector<6x32xf32>
    %19 = vector.extract_strided_slice %16 {offsets = [0, 160], sizes = [6, 32], strides = [1, 1]} : vector<6x192xf32> to vector<6x32xf32>
    %cst_15 = arith.constant 0.000000e+00 : f32
    %20 = vector.broadcast %cst_15 : f32 to vector<1x32xf32>
    %cst_16 = arith.constant dense<0.000000e+00> : vector<1x32xf32>
    %21 = tpu.matmul %20, %2, %cst_16 {dimension_numbers = #tpu.dot_dimension_numbers<[1], [0], [0], [1], [0, 0, 1, 1], [], []>} : vector<1x32xf32>, vector<32x32xf32>, vector<1x32xf32> -> vector<1x32xf32>
    %cst_17 = arith.constant dense<0.000000e+00> : vector<1x32xf32>
    %22 = tpu.matmul %20, %3, %cst_17 {dimension_numbers = #tpu.dot_dimension_numbers<[1], [0], [0], [1], [0, 0, 1, 1], [], []>} : vector<1x32xf32>, vector<32x32xf32>, vector<1x32xf32> -> vector<1x32xf32>
    %cst_18 = arith.constant dense<0.000000e+00> : vector<1x32xf32>
    %23 = tpu.matmul %20, %4, %cst_18 {dimension_numbers = #tpu.dot_dimension_numbers<[1], [0], [0], [1], [0, 0, 1, 1], [], []>} : vector<1x32xf32>, vector<32x32xf32>, vector<1x32xf32> -> vector<1x32xf32>
    %24 = vector.extract_strided_slice %17 {offsets = [0, 0], sizes = [1, 32], strides = [1, 1]} : vector<6x32xf32> to vector<1x32xf32>
    %25 = arith.addf %24, %21 : vector<1x32xf32>
    %26 = arith.negf %25 : vector<1x32xf32>
    %27 = math.exp %26 : vector<1x32xf32>
    %cst_19 = arith.constant 1.000000e+00 : f32
    %28 = vector.broadcast %cst_19 : f32 to vector<1x32xf32>
    %29 = arith.addf %28, %27 : vector<1x32xf32>
    %30 = arith.divf %28, %29 : vector<1x32xf32>
    %31 = vector.extract_strided_slice %18 {offsets = [0, 0], sizes = [1, 32], strides = [1, 1]} : vector<6x32xf32> to vector<1x32xf32>
    %32 = arith.addf %31, %22 : vector<1x32xf32>
    %33 = arith.negf %32 : vector<1x32xf32>
    %34 = math.exp %33 : vector<1x32xf32>
    %cst_20 = arith.constant 1.000000e+00 : f32
    %35 = vector.broadcast %cst_20 : f32 to vector<1x32xf32>
    %36 = arith.addf %35, %34 : vector<1x32xf32>
    %37 = arith.divf %35, %36 : vector<1x32xf32>
    %38 = vector.extract_strided_slice %19 {offsets = [0, 0], sizes = [1, 32], strides = [1, 1]} : vector<6x32xf32> to vector<1x32xf32>
    %39 = arith.addf %23, %8 : vector<1x32xf32>
    %40 = arith.mulf %30, %39 : vector<1x32xf32>
    %41 = arith.addf %38, %40 : vector<1x32xf32>
    %42 = math.tanh %41 : vector<1x32xf32>
    %cst_21 = arith.constant 1.000000e+00 : f32
    %43 = vector.broadcast %cst_21 : f32 to vector<1x32xf32>
    %44 = arith.subf %43, %37 : vector<1x32xf32>
    %45 = arith.mulf %44, %42 : vector<1x32xf32>
    %46 = arith.mulf %37, %20 : vector<1x32xf32>
    %47 = arith.addf %45, %46 : vector<1x32xf32>
    %c0_22 = arith.constant 0 : index
    %c0_23 = arith.constant 0 : index
    %48 = vector.load %arg4[%c0_22, %c0_23] : memref<6x32xf32, #tpu.memory_space<vmem>>, vector<1x32xf32>
    tpu.vector_store %arg4[%c0_22, %c0_23], %47 {strides = array<i32>} : memref<6x32xf32, #tpu.memory_space<vmem>>, vector<1x32xf32>,
    %cst_24 = arith.constant dense<0.000000e+00> : vector<1x32xf32>
    %49 = tpu.matmul %47, %2, %cst_24 {dimension_numbers = #tpu.dot_dimension_numbers<[1], [0], [0], [1], [0, 0, 1, 1], [], []>} : vector<1x32xf32>, vector<32x32xf32>, vector<1x32xf32> -> vector<1x32xf32>
    %cst_25 = arith.constant dense<0.000000e+00> : vector<1x32xf32>
    %50 = tpu.matmul %47, %3, %cst_25 {dimension_numbers = #tpu.dot_dimension_numbers<[1], [0], [0], [1], [0, 0, 1, 1], [], []>} : vector<1x32xf32>, vector<32x32xf32>, vector<1x32xf32> -> vector<1x32xf32>
    %cst_26 = arith.constant dense<0.000000e+00> : vector<1x32xf32>
    %51 = tpu.matmul %47, %4, %cst_26 {dimension_numbers = #tpu.dot_dimension_numbers<[1], [0], [0], [1], [0, 0, 1, 1], [], []>} : vector<1x32xf32>, vector<32x32xf32>, vector<1x32xf32> -> vector<1x32xf32>
    %52 = vector.extract_strided_slice %17 {offsets = [1, 0], sizes = [1, 32], strides = [1, 1]} : vector<6x32xf32> to vector<1x32xf32>
    %53 = arith.addf %52, %49 : vector<1x32xf32>
    %54 = arith.negf %53 : vector<1x32xf32>
    %55 = math.exp %54 : vector<1x32xf32>
    %cst_27 = arith.constant 1.000000e+00 : f32
    %56 = vector.broadcast %cst_27 : f32 to vector<1x32xf32>
    %57 = arith.addf %56, %55 : vector<1x32xf32>
    %58 = arith.divf %56, %57 : vector<1x32xf32>
    %59 = vector.extract_strided_slice %18 {offsets = [1, 0], sizes = [1, 32], strides = [1, 1]} : vector<6x32xf32> to vector<1x32xf32>
    %60 = arith.addf %59, %50 : vector<1x32xf32>
    %61 = arith.negf %60 : vector<1x32xf32>
    %62 = math.exp %61 : vector<1x32xf32>
    %cst_28 = arith.constant 1.000000e+00 : f32
    %63 = vector.broadcast %cst_28 : f32 to vector<1x32xf32>
    %64 = arith.addf %63, %62 : vector<1x32xf32>
    %65 = arith.divf %63, %64 : vector<1x32xf32>
    %66 = vector.extract_strided_slice %19 {offsets = [1, 0], sizes = [1, 32], strides = [1, 1]} : vector<6x32xf32> to vector<1x32xf32>
    %67 = arith.addf %51, %8 : vector<1x32xf32>
    %68 = arith.mulf %58, %67 : vector<1x32xf32>
    %69 = arith.addf %66, %68 : vector<1x32xf32>
    %70 = math.tanh %69 : vector<1x32xf32>
    %cst_29 = arith.constant 1.000000e+00 : f32
    %71 = vector.broadcast %cst_29 : f32 to vector<1x32xf32>
    %72 = arith.subf %71, %65 : vector<1x32xf32>
    %73 = arith.mulf %72, %70 : vector<1x32xf32>
    %74 = arith.mulf %65, %47 : vector<1x32xf32>
    %75 = arith.addf %73, %74 : vector<1x32xf32>
    %c1 = arith.constant 1 : index
    %c0_30 = arith.constant 0 : index
    %76 = vector.load %arg4[%c1, %c0_30] : memref<6x32xf32, #tpu.memory_space<vmem>>, vector<1x32xf32>
    tpu.vector_store %arg4[%c1, %c0_30], %75 {strides = array<i32>} : memref<6x32xf32, #tpu.memory_space<vmem>>, vector<1x32xf32>,
    %cst_31 = arith.constant dense<0.000000e+00> : vector<1x32xf32>
    %77 = tpu.matmul %75, %2, %cst_31 {dimension_numbers = #tpu.dot_dimension_numbers<[1], [0], [0], [1], [0, 0, 1, 1], [], []>} : vector<1x32xf32>, vector<32x32xf32>, vector<1x32xf32> -> vector<1x32xf32>
    %cst_32 = arith.constant dense<0.000000e+00> : vector<1x32xf32>
    %78 = tpu.matmul %75, %3, %cst_32 {dimension_numbers = #tpu.dot_dimension_numbers<[1], [0], [0], [1], [0, 0, 1, 1], [], []>} : vector<1x32xf32>, vector<32x32xf32>, vector<1x32xf32> -> vector<1x32xf32>
    %cst_33 = arith.constant dense<0.000000e+00> : vector<1x32xf32>
    %79 = tpu.matmul %75, %4, %cst_33 {dimension_numbers = #tpu.dot_dimension_numbers<[1], [0], [0], [1], [0, 0, 1, 1], [], []>} : vector<1x32xf32>, vector<32x32xf32>, vector<1x32xf32> -> vector<1x32xf32>
    %80 = vector.extract_strided_slice %17 {offsets = [2, 0], sizes = [1, 32], strides = [1, 1]} : vector<6x32xf32> to vector<1x32xf32>
    %81 = arith.addf %80, %77 : vector<1x32xf32>
    %82 = arith.negf %81 : vector<1x32xf32>
    %83 = math.exp %82 : vector<1x32xf32>
    %cst_34 = arith.constant 1.000000e+00 : f32
    %84 = vector.broadcast %cst_34 : f32 to vector<1x32xf32>
    %85 = arith.addf %84, %83 : vector<1x32xf32>
    %86 = arith.divf %84, %85 : vector<1x32xf32>
    %87 = vector.extract_strided_slice %18 {offsets = [2, 0], sizes = [1, 32], strides = [1, 1]} : vector<6x32xf32> to vector<1x32xf32>
    %88 = arith.addf %87, %78 : vector<1x32xf32>
    %89 = arith.negf %88 : vector<1x32xf32>
    %90 = math.exp %89 : vector<1x32xf32>
    %cst_35 = arith.constant 1.000000e+00 : f32
    %91 = vector.broadcast %cst_35 : f32 to vector<1x32xf32>
    %92 = arith.addf %91, %90 : vector<1x32xf32>
    %93 = arith.divf %91, %92 : vector<1x32xf32>
    %94 = vector.extract_strided_slice %19 {offsets = [2, 0], sizes = [1, 32], strides = [1, 1]} : vector<6x32xf32> to vector<1x32xf32>
    %95 = arith.addf %79, %8 : vector<1x32xf32>
    %96 = arith.mulf %86, %95 : vector<1x32xf32>
    %97 = arith.addf %94, %96 : vector<1x32xf32>
    %98 = math.tanh %97 : vector<1x32xf32>
    %cst_36 = arith.constant 1.000000e+00 : f32
    %99 = vector.broadcast %cst_36 : f32 to vector<1x32xf32>
    %100 = arith.subf %99, %93 : vector<1x32xf32>
    %101 = arith.mulf %100, %98 : vector<1x32xf32>
    %102 = arith.mulf %93, %75 : vector<1x32xf32>
    %103 = arith.addf %101, %102 : vector<1x32xf32>
    %c2 = arith.constant 2 : index
    %c0_37 = arith.constant 0 : index
    %104 = vector.load %arg4[%c2, %c0_37] : memref<6x32xf32, #tpu.memory_space<vmem>>, vector<1x32xf32>
    tpu.vector_store %arg4[%c2, %c0_37], %103 {strides = array<i32>} : memref<6x32xf32, #tpu.memory_space<vmem>>, vector<1x32xf32>,
    %cst_38 = arith.constant dense<0.000000e+00> : vector<1x32xf32>
    %105 = tpu.matmul %103, %2, %cst_38 {dimension_numbers = #tpu.dot_dimension_numbers<[1], [0], [0], [1], [0, 0, 1, 1], [], []>} : vector<1x32xf32>, vector<32x32xf32>, vector<1x32xf32> -> vector<1x32xf32>
    %cst_39 = arith.constant dense<0.000000e+00> : vector<1x32xf32>
    %106 = tpu.matmul %103, %3, %cst_39 {dimension_numbers = #tpu.dot_dimension_numbers<[1], [0], [0], [1], [0, 0, 1, 1], [], []>} : vector<1x32xf32>, vector<32x32xf32>, vector<1x32xf32> -> vector<1x32xf32>
    %cst_40 = arith.constant dense<0.000000e+00> : vector<1x32xf32>
    %107 = tpu.matmul %103, %4, %cst_40 {dimension_numbers = #tpu.dot_dimension_numbers<[1], [0], [0], [1], [0, 0, 1, 1], [], []>} : vector<1x32xf32>, vector<32x32xf32>, vector<1x32xf32> -> vector<1x32xf32>
    %108 = vector.extract_strided_slice %17 {offsets = [3, 0], sizes = [1, 32], strides = [1, 1]} : vector<6x32xf32> to vector<1x32xf32>
    %109 = arith.addf %108, %105 : vector<1x32xf32>
    %110 = arith.negf %109 : vector<1x32xf32>
    %111 = math.exp %110 : vector<1x32xf32>
    %cst_41 = arith.constant 1.000000e+00 : f32
    %112 = vector.broadcast %cst_41 : f32 to vector<1x32xf32>
    %113 = arith.addf %112, %111 : vector<1x32xf32>
    %114 = arith.divf %112, %113 : vector<1x32xf32>
    %115 = vector.extract_strided_slice %18 {offsets = [3, 0], sizes = [1, 32], strides = [1, 1]} : vector<6x32xf32> to vector<1x32xf32>
    %116 = arith.addf %115, %106 : vector<1x32xf32>
    %117 = arith.negf %116 : vector<1x32xf32>
    %118 = math.exp %117 : vector<1x32xf32>
    %cst_42 = arith.constant 1.000000e+00 : f32
    %119 = vector.broadcast %cst_42 : f32 to vector<1x32xf32>
    %120 = arith.addf %119, %118 : vector<1x32xf32>
    %121 = arith.divf %119, %120 : vector<1x32xf32>
    %122 = vector.extract_strided_slice %19 {offsets = [3, 0], sizes = [1, 32], strides = [1, 1]} : vector<6x32xf32> to vector<1x32xf32>
    %123 = arith.addf %107, %8 : vector<1x32xf32>
    %124 = arith.mulf %114, %123 : vector<1x32xf32>
    %125 = arith.addf %122, %124 : vector<1x32xf32>
    %126 = math.tanh %125 : vector<1x32xf32>
    %cst_43 = arith.constant 1.000000e+00 : f32
    %127 = vector.broadcast %cst_43 : f32 to vector<1x32xf32>
    %128 = arith.subf %127, %121 : vector<1x32xf32>
    %129 = arith.mulf %128, %126 : vector<1x32xf32>
    %130 = arith.mulf %121, %103 : vector<1x32xf32>
    %131 = arith.addf %129, %130 : vector<1x32xf32>
    %c3 = arith.constant 3 : index
    %c0_44 = arith.constant 0 : index
    %132 = vector.load %arg4[%c3, %c0_44] : memref<6x32xf32, #tpu.memory_space<vmem>>, vector<1x32xf32>
    tpu.vector_store %arg4[%c3, %c0_44], %131 {strides = array<i32>} : memref<6x32xf32, #tpu.memory_space<vmem>>, vector<1x32xf32>,
    %cst_45 = arith.constant dense<0.000000e+00> : vector<1x32xf32>
    %133 = tpu.matmul %131, %2, %cst_45 {dimension_numbers = #tpu.dot_dimension_numbers<[1], [0], [0], [1], [0, 0, 1, 1], [], []>} : vector<1x32xf32>, vector<32x32xf32>, vector<1x32xf32> -> vector<1x32xf32>
    %cst_46 = arith.constant dense<0.000000e+00> : vector<1x32xf32>
    %134 = tpu.matmul %131, %3, %cst_46 {dimension_numbers = #tpu.dot_dimension_numbers<[1], [0], [0], [1], [0, 0, 1, 1], [], []>} : vector<1x32xf32>, vector<32x32xf32>, vector<1x32xf32> -> vector<1x32xf32>
    %cst_47 = arith.constant dense<0.000000e+00> : vector<1x32xf32>
    %135 = tpu.matmul %131, %4, %cst_47 {dimension_numbers = #tpu.dot_dimension_numbers<[1], [0], [0], [1], [0, 0, 1, 1], [], []>} : vector<1x32xf32>, vector<32x32xf32>, vector<1x32xf32> -> vector<1x32xf32>
    %136 = vector.extract_strided_slice %17 {offsets = [4, 0], sizes = [1, 32], strides = [1, 1]} : vector<6x32xf32> to vector<1x32xf32>
    %137 = arith.addf %136, %133 : vector<1x32xf32>
    %138 = arith.negf %137 : vector<1x32xf32>
    %139 = math.exp %138 : vector<1x32xf32>
    %cst_48 = arith.constant 1.000000e+00 : f32
    %140 = vector.broadcast %cst_48 : f32 to vector<1x32xf32>
    %141 = arith.addf %140, %139 : vector<1x32xf32>
    %142 = arith.divf %140, %141 : vector<1x32xf32>
    %143 = vector.extract_strided_slice %18 {offsets = [4, 0], sizes = [1, 32], strides = [1, 1]} : vector<6x32xf32> to vector<1x32xf32>
    %144 = arith.addf %143, %134 : vector<1x32xf32>
    %145 = arith.negf %144 : vector<1x32xf32>
    %146 = math.exp %145 : vector<1x32xf32>
    %cst_49 = arith.constant 1.000000e+00 : f32
    %147 = vector.broadcast %cst_49 : f32 to vector<1x32xf32>
    %148 = arith.addf %147, %146 : vector<1x32xf32>
    %149 = arith.divf %147, %148 : vector<1x32xf32>
    %150 = vector.extract_strided_slice %19 {offsets = [4, 0], sizes = [1, 32], strides = [1, 1]} : vector<6x32xf32> to vector<1x32xf32>
    %151 = arith.addf %135, %8 : vector<1x32xf32>
    %152 = arith.mulf %142, %151 : vector<1x32xf32>
    %153 = arith.addf %150, %152 : vector<1x32xf32>
    %154 = math.tanh %153 : vector<1x32xf32>
    %cst_50 = arith.constant 1.000000e+00 : f32
    %155 = vector.broadcast %cst_50 : f32 to vector<1x32xf32>
    %156 = arith.subf %155, %149 : vector<1x32xf32>
    %157 = arith.mulf %156, %154 : vector<1x32xf32>
    %158 = arith.mulf %149, %131 : vector<1x32xf32>
    %159 = arith.addf %157, %158 : vector<1x32xf32>
    %c4 = arith.constant 4 : index
    %c0_51 = arith.constant 0 : index
    %160 = vector.load %arg4[%c4, %c0_51] : memref<6x32xf32, #tpu.memory_space<vmem>>, vector<1x32xf32>
    tpu.vector_store %arg4[%c4, %c0_51], %159 {strides = array<i32>} : memref<6x32xf32, #tpu.memory_space<vmem>>, vector<1x32xf32>,
    %cst_52 = arith.constant dense<0.000000e+00> : vector<1x32xf32>
    %161 = tpu.matmul %159, %2, %cst_52 {dimension_numbers = #tpu.dot_dimension_numbers<[1], [0], [0], [1], [0, 0, 1, 1], [], []>} : vector<1x32xf32>, vector<32x32xf32>, vector<1x32xf32> -> vector<1x32xf32>
    %cst_53 = arith.constant dense<0.000000e+00> : vector<1x32xf32>
    %162 = tpu.matmul %159, %3, %cst_53 {dimension_numbers = #tpu.dot_dimension_numbers<[1], [0], [0], [1], [0, 0, 1, 1], [], []>} : vector<1x32xf32>, vector<32x32xf32>, vector<1x32xf32> -> vector<1x32xf32>
    %cst_54 = arith.constant dense<0.000000e+00> : vector<1x32xf32>
    %163 = tpu.matmul %159, %4, %cst_54 {dimension_numbers = #tpu.dot_dimension_numbers<[1], [0], [0], [1], [0, 0, 1, 1], [], []>} : vector<1x32xf32>, vector<32x32xf32>, vector<1x32xf32> -> vector<1x32xf32>
    %164 = vector.extract_strided_slice %17 {offsets = [5, 0], sizes = [1, 32], strides = [1, 1]} : vector<6x32xf32> to vector<1x32xf32>
    %165 = arith.addf %164, %161 : vector<1x32xf32>
    %166 = arith.negf %165 : vector<1x32xf32>
    %167 = math.exp %166 : vector<1x32xf32>
    %cst_55 = arith.constant 1.000000e+00 : f32
    %168 = vector.broadcast %cst_55 : f32 to vector<1x32xf32>
    %169 = arith.addf %168, %167 : vector<1x32xf32>
    %170 = arith.divf %168, %169 : vector<1x32xf32>
    %171 = vector.extract_strided_slice %18 {offsets = [5, 0], sizes = [1, 32], strides = [1, 1]} : vector<6x32xf32> to vector<1x32xf32>
    %172 = arith.addf %171, %162 : vector<1x32xf32>
    %173 = arith.negf %172 : vector<1x32xf32>
    %174 = math.exp %173 : vector<1x32xf32>
    %cst_56 = arith.constant 1.000000e+00 : f32
    %175 = vector.broadcast %cst_56 : f32 to vector<1x32xf32>
    %176 = arith.addf %175, %174 : vector<1x32xf32>
    %177 = arith.divf %175, %176 : vector<1x32xf32>
    %178 = vector.extract_strided_slice %19 {offsets = [5, 0], sizes = [1, 32], strides = [1, 1]} : vector<6x32xf32> to vector<1x32xf32>
    %179 = arith.addf %163, %8 : vector<1x32xf32>
    %180 = arith.mulf %170, %179 : vector<1x32xf32>
    %181 = arith.addf %178, %180 : vector<1x32xf32>
    %182 = math.tanh %181 : vector<1x32xf32>
    %cst_57 = arith.constant 1.000000e+00 : f32
    %183 = vector.broadcast %cst_57 : f32 to vector<1x32xf32>
    %184 = arith.subf %183, %177 : vector<1x32xf32>
    %185 = arith.mulf %184, %182 : vector<1x32xf32>
    %186 = arith.mulf %177, %159 : vector<1x32xf32>
    %187 = arith.addf %185, %186 : vector<1x32xf32>
    %c5 = arith.constant 5 : index
    %c0_58 = arith.constant 0 : index
    %188 = vector.load %arg4[%c5, %c0_58] : memref<6x32xf32, #tpu.memory_space<vmem>>, vector<1x32xf32>
    tpu.vector_store %arg4[%c5, %c0_58], %187 {strides = array<i32>} : memref<6x32xf32, #tpu.memory_space<vmem>>, vector<1x32xf32>,
    %c0_59 = arith.constant 0 : index
    %c0_60 = arith.constant 0 : index
    %189 = vector.load %arg4[%c0_59, %c0_60] : memref<6x32xf32, #tpu.memory_space<vmem>>, vector<6x32xf32>
    %cst_61 = arith.constant dense<0.000000e+00> : vector<6x32xf32>
    %190 = tpu.matmul %189, %5, %cst_61 {dimension_numbers = #tpu.dot_dimension_numbers<[1], [0], [0], [1], [0, 0, 1, 1], [], []>} : vector<6x32xf32>, vector<32x32xf32>, vector<6x32xf32> -> vector<6x32xf32>
    %191 = vector.broadcast %9 : vector<1x32xf32> to vector<6x32xf32>
    %192 = arith.addf %190, %191 : vector<6x32xf32>
    %193 = math.tanh %192 : vector<6x32xf32>
    %194 = arith.mulf %193, %13 : vector<6x32xf32>
    %cst_62 = arith.constant dense<0.000000e+00> : vector<32xf32>
    %195 = vector.multi_reduction <add>, %194, %cst_62 [0] : vector<6x32xf32> to vector<32xf32>
    %196 = vector.shape_cast %195 : vector<32xf32> to vector<1x32xf32>
    %cst_63 = arith.constant dense<0.000000e+00> : vector<1x128xf32>
    %197 = tpu.matmul %196, %6, %cst_63 {dimension_numbers = #tpu.dot_dimension_numbers<[1], [0], [0], [1], [0, 0, 1, 1], [], []>} : vector<1x32xf32>, vector<32x128xf32>, vector<1x128xf32> -> vector<1x128xf32>
    %198 = arith.addf %197, %10 : vector<1x128xf32>
    %c0_64 = arith.constant 0 : index
    %c0_65 = arith.constant 0 : index
    %c0_66 = arith.constant 0 : index
    %199 = vector.load %arg3[%c0_64, %c0_65, %c0_66] : memref<1x1x128xf32, #tpu.memory_space<vmem>>, vector<1x1x128xf32>
    %200 = vector.shape_cast %199 : vector<1x1x128xf32> to vector<1x128xf32>
    %201 = vector.shape_cast %198 : vector<1x128xf32> to vector<1x1x128xf32>
    tpu.vector_store %arg3[%c0_64, %c0_65, %c0_66], %201 {strides = array<i32>} : memref<1x1x128xf32, #tpu.memory_space<vmem>>, vector<1x1x128xf32>,
    return
  }
  func.func @transform_0(%arg0: i32) -> (i32, i32, i32) {
    %c0_i32 = arith.constant 0 : i32
    %c0_i32_0 = arith.constant 0 : i32
    %c0_i32_1 = arith.constant 0 : i32
    return %arg0, %c0_i32, %c0_i32_0 : i32, i32, i32
  }
  func.func @transform_1(%arg0: i32) -> (i32, i32) {
    %c0_i32 = arith.constant 0 : i32
    %c0_i32_0 = arith.constant 0 : i32
    %c0_i32_1 = arith.constant 0 : i32
    return %c0_i32, %c0_i32_0 : i32, i32
  }
  func.func @transform_2(%arg0: i32) -> (i32, i32, i32) {
    %c0_i32 = arith.constant 0 : i32
    %c0_i32_0 = arith.constant 0 : i32
    %c0_i32_1 = arith.constant 0 : i32
    return %arg0, %c0_i32, %c0_i32_0 : i32, i32, i32
  }
}

</mosaic_0001>

<llo_original>
// kernel: tpu_custom_call.1
$region0: #{tpu_custom_call.1}
  #allocation0 [shape = 'u32[]', space=smem, size = 0x4, offset = 0x4, fixed_abs, tag = 'smem constant byte address 0x4 - core index']
  #allocation1 [shape = 'u32[144,128]{1,0:T(1,128)}', space=vmem, size = 0x12000, scoped, tag = 'internal scratch']
  #allocation2 [shape = 'f32[6,32]{1,0:T(8,128)}', space=vmem, size = 0x1000, scoped, tag = 'scratch operand']
  %s0 = inlined_call_operand.vmem [shape: f32[4,6,32], index: 0, kind: input, shape index: {}]
  %s1 = inlined_call_operand.vmem [shape: f32[360,192], index: 1, kind: input, shape index: {}]
  %s2 = inlined_call_operand.hbm [shape: f32[4,1,128], index: 2, kind: output, shape index: {}]
  %s3 = sld [smem:[#allocation0]]
  $region41: #{tpu_custom_call.1} parent=0
    _
  %s5 = ssub.s32 1, %s3
  %s6 = scalar_select 0, %s5, %s3
  $region1: #{tpu_custom_call.1} parent=0
    #allocation3 [shape = 'u8[1024]{0}', space=vmem, size = 0x400, scoped, tag = 'output window, operand 0']
    #allocation4 [shape = 's32[2]{0}', space=sflag, size = 0x8, scoped, tag = 'scoped memory for tpu_custom_call.1']
    %7 = vsyncpa [#allocation4], 0
    %s8 = scalar_lea.sflag [#allocation4], 1
    %9 = vsyncpa %s8, 0
    loop: start=0, step=1, limit=6
    $region2: #{tpu_custom_call.1} parent=1 // loop_pre_header
      _
    $region3: #{tpu_custom_call.1} parent=1 // loop_header
      %s11 = sphi 0, %s15
      %p12 = scmp.ge.s32.totalorder %s11, 6
      %s21 = sphi 0, %s23
      %s24 = sphi 0, %s21
      %s25 = sphi 0, %s24
      %s41 = sphi 0, %s25
      %s45 = sphi 0, %s45
      %s47 = sphi 0, %s45
      %s48 = sphi 0, %s47
      %s62 = sphi 0, %s48
      %s68 = sphi 0, %s70
      %s71 = sphi 0, %s68
      %s72 = sphi 0, %s71
      %s88 = sphi 0, %s72
    $region4: #{tpu_custom_call.1} parent=1 // loop_header_branch
      %14 = sbr.rel (%p12) target = $region8
    $region5: #{tpu_custom_call.1} parent=1 // loop_body
      %s16 = ssub.s32 %s11, 1
      %s17 = ssub.s32 %s11, 2
      %s18 = sadd.s32 %s11, 1
      %s19 = ssub.s32 %s11, %s18
      %p20 = scmp.eq.s32.totalorder %s19, 0
      %s22 = sadd.s32 %s21, 1
      %s23 = scalar_select %p20, %s21, %s22
      %p26 = pneg %p20
      %p27 = scmp.eq.s32.totalorder %s11, 3
      %p28 = por %p26, %p27
      %p29 = scmp.ne.s32.totalorder %s21, %s24
      %p30 = scmp.eq.s32.totalorder %s11, 0
      %p31 = por %p29, %p30
      %p32 = scmp.ne.s32.totalorder %s21, %s24
      %p33 = scmp.eq.s32.totalorder %s16, 3
      %p34 = por %p32, %p33
      %p35 = scmp.ne.s32.totalorder %s24, %s25
      %p36 = scmp.eq.s32.totalorder %s16, 0
      %p37 = por %p35, %p36
      %p38 = scmp.ne.s32.totalorder %s24, %s25
      %p39 = scmp.eq.s32.totalorder %s17, 3
      %p40 = por %p38, %p39
      %p42 = scmp.ne.s32.totalorder %s25, %s41
      %p43 = scmp.eq.s32.totalorder %s17, 0
      %p44 = por %p42, %p43
      %s46 = sadd.s32 %s45, 1
      %p49 = scmp.eq.s32.totalorder %s11, 3
      %p50 = scmp.ne.s32.totalorder %s45, %s47
      %p51 = scmp.eq.s32.totalorder %s11, 0
      %p52 = por %p50, %p51
      %p53 = scmp.ne.s32.totalorder %s45, %s47
      %p54 = scmp.eq.s32.totalorder %s16, 3
      %p55 = por %p53, %p54
      %p56 = scmp.ne.s32.totalorder %s47, %s48
      %p57 = scmp.eq.s32.totalorder %s16, 0
      %p58 = por %p56, %p57
      %p59 = scmp.ne.s32.totalorder %s47, %s48
      %p60 = scmp.eq.s32.totalorder %s17, 3
      %p61 = por %p59, %p60
      %p63 = scmp.ne.s32.totalorder %s48, %s62
      %p64 = scmp.eq.s32.totalorder %s17, 0
      %p65 = por %p63, %p64
      %s66 = ssub.s32 %s11, %s18
      %p67 = scmp.eq.s32.totalorder %s66, 0
      %s69 = sadd.s32 %s68, 1
      %s70 = scalar_select %p67, %s68, %s69
      %p73 = pneg %p67
      %p74 = scmp.eq.s32.totalorder %s11, 3
      %p75 = por %p73, %p74
      %p76 = scmp.ne.s32.totalorder %s68, %s71
      %p77 = scmp.eq.s32.totalorder %s11, 0
      %p78 = por %p76, %p77
      %p79 = scmp.ne.s32.totalorder %s68, %s71
      %p80 = scmp.eq.s32.totalorder %s16, 3
      %p81 = por %p79, %p80
      %p82 = scmp.ne.s32.totalorder %s71, %s72
      %p83 = scmp.eq.s32.totalorder %s16, 0
      %p84 = por %p82, %p83
      %p85 = scmp.ne.s32.totalorder %s71, %s72
      %p86 = scmp.eq.s32.totalorder %s17, 3
      %p87 = por %p85, %p86
      %p89 = scmp.ne.s32.totalorder %s72, %s88
      %p90 = scmp.eq.s32.totalorder %s17, 0
      %p91 = por %p89, %p90
      %p92 = scmp.le.s32.totalorder 1, %s11
      %p93 = scmp.lt.s32.totalorder %s11, 5
      %p94 = pnand %p92, %p93
      %p95 = pneg %p94
      // Predicated region
      $region9: #{tpu_custom_call.1} parent=5 // pred_check
        _
      $region10: #{tpu_custom_call.1} parent=5 // pred_check_branch
        %97 = sbr.rel (%p94) target = $region12
      $region11: #{tpu_custom_call.1} parent=5 // pred_region
        %s98 = ssub.s32 %s11, 1
        // Predicated region
        $region13: #{tpu_custom_call.1} parent=11 // pred_check
          %p99 = pneg %p58
        $region14: #{tpu_custom_call.1} parent=11 // pred_check_branch
          %101 = sbr.rel (%p99) target = $region16
        $region15: #{tpu_custom_call.1} parent=11 // pred_region
          _
        $region16: #{tpu_custom_call.1} parent=11 // pred_fallthru
          _
      $region12: #{tpu_custom_call.1} parent=5 // pred_fallthru
        _
      %p102 = scmp.lt.s32.totalorder %s11, 4
      // Predicated region
      $region17: #{tpu_custom_call.1} parent=5 // pred_check
        %p103 = pneg %p102
      $region18: #{tpu_custom_call.1} parent=5 // pred_check_branch
        %105 = sbr.rel (%p103) target = $region20
      $region19: #{tpu_custom_call.1} parent=5 // pred_region
        // Predicated region
        $region21: #{tpu_custom_call.1} parent=19 // pred_check
          %p106 = pneg %p31
        $region22: #{tpu_custom_call.1} parent=19 // pred_check_branch
          %108 = sbr.rel (%p106) target = $region24
        $region23: #{tpu_custom_call.1} parent=19 // pred_region
          %p109 = scmp.lt.s32.totalorder %s11, 3
          %s110 = scalar_select %p109, %s11, 3
          %s111 = smul.addr %s110, 8
          %s112 = scalar_lea.vmem %s0, %s111
        $region24: #{tpu_custom_call.1} parent=19 // pred_fallthru
          _
      $region20: #{tpu_custom_call.1} parent=5 // pred_fallthru
        _
      %p113 = scmp.le.s32.totalorder 1, %s11
      %p114 = scmp.lt.s32.totalorder %s11, 5
      %p115 = pnand %p113, %p114
      %p116 = pneg %p115
      // Predicated region
      $region25: #{tpu_custom_call.1} parent=5 // pred_check
        _
      $region26: #{tpu_custom_call.1} parent=5 // pred_check_branch
        %118 = sbr.rel (%p115) target = $region28
      $region27: #{tpu_custom_call.1} parent=5 // pred_region
        %s119 = ssub.s32 %s11, 1
        %p120 = scmp.lt.s32.totalorder %s16, 3
        %s121 = scalar_select %p120, %s16, 3
        %s122 = smul.addr %s121, 8
        %s123 = scalar_lea.vmem %s0, %s122
        %p124 = pneg %p37
        %p125 = pneg %p34
        %p126 = pneg %p58
        %p127 = pneg %p55
        %p128 = pneg %p84
        %p129 = pneg %p81
        %s130 = sand.u32 %s71, 1
        %s131 = scalar_lea.sflag [#allocation4], %s130
        %s132 = sand.u32 %s71, 1
        %s133 = scalar_lea.vmem [#allocation3], %s132
        %p134 = scmp.lt.s32.totalorder %s16, 3
        %s135 = scalar_select %p134, %s16, 3
        %s136 = smul.addr %s135, 8
        %s137 = scalar_lea.vmem %s0, %s136
        %v138 = vld [vmem:[%s1] sm:$0xff]
        %v139 = vld [vmem:[%s1 + $0x10] sm:$0xff]
        %v140 = vld [vmem:[%s1 + $0x20] sm:$0xff]
        %v141 = vld [vmem:[%s1 + $0x30] sm:$0xff]
        %v142 = vld [vmem:[%s1 + $0x40] sm:$0xff]
        %v143 = vld [vmem:[%s1 + $0x48] sm:$0xff]
        %v144 = vld [vmem:[%s1 + $0x50] sm:$0xff]
        %v145 = vld [vmem:[%s1 + $0x58] sm:$0xff]
        %v146 = vld [vmem:[%s1 + $0x60] sm:$0xff]
        %v147 = vld [vmem:[%s1 + $0x68] sm:$0xff]
        %v148 = vld [vmem:[%s1 + $0x70] sm:$0xff]
        %v149 = vld [vmem:[%s1 + $0x78] sm:$0xff]
        %v150 = vld [vmem:[%s1 + $0x140] sm:$0xff]
        %v151 = vld [vmem:[%s1 + $0x150] sm:$0xff]
        %v152 = vld [vmem:[%s1 + $0x160] sm:$0xff]
        %v153 = vld [vmem:[%s1 + $0x170] sm:$0xff]
        %v154 = vld [vmem:[%s1 + $0x180] sm:$0xff]
        %v155 = vld [vmem:[%s1 + $0x190] sm:$0xff]
        %v156 = vld [vmem:[%s1 + $0x1a0] sm:$0xff]
        %v157 = vld [vmem:[%s1 + $0x1b0] sm:$0xff]
        %v158 = vld [vmem:[%s1 + $0x1c0] sm:$0xff]
        %v159 = vld [vmem:[%s1 + $0x1d0] sm:$0xff]
        %v160 = vld [vmem:[%s1 + $0x1e0] sm:$0xff]
        %v161 = vld [vmem:[%s1 + $0x1f0] sm:$0xff]
        %v162 = vld [vmem:[%s1 + $0x200] sm:$0xff]
        %v163 = vld [vmem:[%s1 + $0x210] sm:$0xff]
        %v164 = vld [vmem:[%s1 + $0x220] sm:$0xff]
        %v165 = vld [vmem:[%s1 + $0x230] sm:$0xff]
        %v166 = vld [vmem:[%s1 + $0x240] sm:$0xff]
        %v167 = vld [vmem:[%s1 + $0x250] sm:$0xff]
        %v168 = vld [vmem:[%s1 + $0x260] sm:$0xff]
        %v169 = vld [vmem:[%s1 + $0x270] sm:$0xff]
        %s170 = scalar_lea.vmem %s1, 640
        %v171 = vld [vmem:[%s170] ss:$8 sm:$0x3]
        %v172 = vld [vmem:[%s1 + $0x2a0] ss:$0 sm:$0xff]
        %v173 = vld [vmem:[%s1 + $0x2b0] ss:$0 sm:$0xff]
        %v174 = vld [vmem:[%s1 + $0x2c0] ss:$0 sm:$0xff]
        %v175 = vld [vmem:[%s137] sm:$0x3f]
        %vm176 = vcmask 261120
        %v178 = vsel %vm176, %v175, 0
        %180 = vmatprep.subr.mxu0 0.0
        %181 = vmatpush1.msra.mxu0 %v138
        %182 = vmatprep.subr.mxu0 0.0
        %183 = vmatpush1.msra.mxu0 %v139
        %184 = vmatprep.subr.mxu0 0.0
        %185 = vmatpush1.msra.mxu0 %v140
        %186 = vmatprep.subr.mxu0 0.0
        %187 = vmatpush1.msra.mxu0 %v141
        %188 = vmatprep.subr.mxu0 0.0
        %189 = vmatpush1.msra.mxu0 0.0
        %190 = vmatprep.subr.mxu0 0.0
        %191 = vmatpush1.msra.mxu0 0.0
        %192 = vmatprep.subr.mxu0 0.0
        %193 = vmatpush1.msra.mxu0 0.0
        %194 = vmatprep.subr.mxu0 0.0
        %195 = vmatpush1.msra.mxu0 0.0
        %196 = vmatprep.subr.mxu0 0.0
        %197 = vmatpush1.msra.mxu0 0.0
        %198 = vmatprep.subr.mxu0 0.0
        %199 = vmatpush1.msra.mxu0 0.0
        %200 = vmatprep.subr.mxu0 0.0
        %201 = vmatpush1.msra.mxu0 0.0
        %202 = vmatprep.subr.mxu0 0.0
        %203 = vmatpush1.msra.mxu0 0.0
        %204 = vmatprep.subr.mxu0 0.0
        %205 = vmatpush1.msra.mxu0 0.0
        %206 = vmatprep.subr.mxu0 0.0
        %207 = vmatpush1.msra.mxu0 0.0
        %208 = vmatprep.subr.mxu0 0.0
        %209 = vmatpush1.msra.mxu0 0.0
        %210 = vmatprep.subr.mxu0 0.0
        %211 = vmatpush1.msra.mxu0 0.0
        %212 = vmatprep.subr.mxu0 0.0
        %213 = vmatpush1.msra.mxu0 0.0
        %214 = vmatprep.subr.mxu0 0.0
        %215 = vmatpush1.msra.mxu0 0.0
        %216 = vmatprep.subr.mxu0 0.0
        %217 = vmatpush1.msra.mxu0 0.0
        %218 = vmatprep.subr.mxu0 0.0
        %219 = vmatpush1.msra.mxu0 0.0
        %220 = vmatprep.subr.mxu0 0.0
        %221 = vmatpush1.msra.mxu0 0.0
        %222 = vmatprep.subr.mxu0 0.0
        %223 = vmatpush1.msra.mxu0 0.0
        %224 = vmatprep.subr.mxu0 0.0
        %225 = vmatpush1.msra.mxu0 0.0
        %226 = vmatprep.subr.mxu0 0.0
        %227 = vmatpush1.msra.mxu0 0.0
        %228 = vmatprep.subr.mxu0 0.0
        %229 = vmatpush1.msra.mxu0 0.0
        %230 = vmatprep.subr.mxu0 0.0
        %231 = vmatpush1.msra.mxu0 0.0
        %232 = vmatprep.subr.mxu0 0.0
        %233 = vmatpush1.msra.mxu0 0.0
        %234 = vmatprep.subr.mxu0 0.0
        %235 = vmatpush1.msra.mxu0 0.0
        %236 = vmatprep.subr.mxu0 0.0
        %237 = vmatpush1.msra.mxu0 0.0
        %238 = vmatprep.subr.mxu0 0.0
        %239 = vmatpush1.msra.mxu0 0.0
        %240 = vmatprep.subr.mxu0 0.0
        %241 = vmatpush1.msra.mxu0 0.0
        %242 = vmatprep.subr.mxu0 0.0
        %243 = vmatpush1.msra.mxu0 0.0
        %244 = vmatprep.mubr.f32.mxu0 0.0
        %245 = vmatmul.mubr.f32.gmra.mrb[0].mxu0 %v178
        %v246 = vpop.f32.mrb[0].mxu0
        %v247 = vadd.f32 0.0, %v246
        %v248 = vpop.f32.mrb[0].mxu0
        %249 = vdwg.mxu0
        %v251 = vlaneseq
        %v252 = vshrl.u32 %v251, 7
        %v253 = vsub.s32 0, %v252
        %v254 = vrot.slane %v171, %v253
        %v255 = vlaneseq
        %v256 = vshrl.u32 %v255, 7
        %v257 = vsub.s32 1, %v256
        %v258 = vrot.slane %v171, %v257
        %v262 = vsel %vm176, %v247, 0
        %264 = vmatprep.subr.mxu0 %v143
        %265 = vmatpush1.msra.mxu0 %v142
        %266 = vmatprep.subr.mxu0 %v145
        %267 = vmatpush1.msra.mxu0 %v144
        %268 = vmatprep.subr.mxu0 %v147
        %269 = vmatpush1.msra.mxu0 %v146
        %270 = vmatprep.subr.mxu0 %v149
        %271 = vmatpush1.msra.mxu0 %v148
        %272 = vmatprep.subr.mxu0 0.0
        %273 = vmatpush1.msra.mxu0 0.0
        %274 = vmatprep.subr.mxu0 0.0
        %275 = vmatpush1.msra.mxu0 0.0
        %276 = vmatprep.subr.mxu0 0.0
        %277 = vmatpush1.msra.mxu0 0.0
        %278 = vmatprep.subr.mxu0 0.0
        %279 = vmatpush1.msra.mxu0 0.0
        %280 = vmatprep.subr.mxu0 0.0
        %281 = vmatpush1.msra.mxu0 0.0
        %282 = vmatprep.subr.mxu0 0.0
        %283 = vmatpush1.msra.mxu0 0.0
        %284 = vmatprep.subr.mxu0 0.0
        %285 = vmatpush1.msra.mxu0 0.0
        %286 = vmatprep.subr.mxu0 0.0
        %287 = vmatpush1.msra.mxu0 0.0
        %288 = vmatprep.subr.mxu0 0.0
        %289 = vmatpush1.msra.mxu0 0.0
        %290 = vmatprep.subr.mxu0 0.0
        %291 = vmatpush1.msra.mxu0 0.0
        %292 = vmatprep.subr.mxu0 0.0
        %293 = vmatpush1.msra.mxu0 0.0
        %294 = vmatprep.subr.mxu0 0.0
        %295 = vmatpush1.msra.mxu0 0.0
        %296 = vmatprep.subr.mxu0 0.0
        %297 = vmatpush1.msra.mxu0 0.0
        %298 = vmatprep.subr.mxu0 0.0
        %299 = vmatpush1.msra.mxu0 0.0
        %300 = vmatprep.subr.mxu0 0.0
        %301 = vmatpush1.msra.mxu0 0.0
        %302 = vmatprep.subr.mxu0 0.0
        %303 = vmatpush1.msra.mxu0 0.0
        %304 = vmatprep.subr.mxu0 0.0
        %305 = vmatpush1.msra.mxu0 0.0
        %306 = vmatprep.subr.mxu0 0.0
        %307 = vmatpush1.msra.mxu0 0.0
        %308 = vmatprep.subr.mxu0 0.0
        %309 = vmatpush1.msra.mxu0 0.0
        %310 = vmatprep.subr.mxu0 0.0
        %311 = vmatpush1.msra.mxu0 0.0
        %312 = vmatprep.subr.mxu0 0.0
        %313 = vmatpush1.msra.mxu0 0.0
        %314 = vmatprep.subr.mxu0 0.0
        %315 = vmatpush1.msra.mxu0 0.0
        %316 = vmatprep.subr.mxu0 0.0
        %317 = vmatpush1.msra.mxu0 0.0
        %318 = vmatprep.subr.mxu0 0.0
        %319 = vmatpush1.msra.mxu0 0.0
        %320 = vmatprep.subr.mxu0 0.0
        %321 = vmatpush1.msra.mxu0 0.0
        %322 = vmatprep.subr.mxu0 0.0
        %323 = vmatpush1.msra.mxu0 0.0
        %324 = vmatprep.subr.mxu0 0.0
        %325 = vmatpush1.msra.mxu0 0.0
        %326 = vmatprep.subr.mxu0 0.0
        %327 = vmatpush1.msra.mxu0 0.0
        %328 = vmatprep.mubr.f32.mxu0 0.0
        %329 = vmatmul.mubr.f32.gmra.mrb[0].mxu0 %v262
        %v330 = vpop.f32.mrb[0].mxu0
        %v331 = vadd.f32 %v254, %v330
        %v332 = vpop.f32.mrb[0].mxu0
        %v333 = vadd.f32 %v258, %v332
        %334 = vdwg.mxu0
        %v336 = vsel %vm176, 0.0, 0
        %338 = vmatprep.subr.mxu0 0.0
        %339 = vmatpush1.msra.mxu0 %v150
        %340 = vmatprep.subr.mxu0 0.0
        %341 = vmatpush1.msra.mxu0 %v151
        %342 = vmatprep.subr.mxu0 0.0
        %343 = vmatpush1.msra.mxu0 %v152
        %344 = vmatprep.subr.mxu0 0.0
        %345 = vmatpush1.msra.mxu0 %v153
        %346 = vmatprep.subr.mxu0 0.0
        %347 = vmatpush1.msra.mxu0 0.0
        %348 = vmatprep.subr.mxu0 0.0
        %349 = vmatpush1.msra.mxu0 0.0
        %350 = vmatprep.subr.mxu0 0.0
        %351 = vmatpush1.msra.mxu0 0.0
        %352 = vmatprep.subr.mxu0 0.0
        %353 = vmatpush1.msra.mxu0 0.0
        %354 = vmatprep.subr.mxu0 0.0
        %355 = vmatpush1.msra.mxu0 0.0
        %356 = vmatprep.subr.mxu0 0.0
        %357 = vmatpush1.msra.mxu0 0.0
        %358 = vmatprep.subr.mxu0 0.0
        %359 = vmatpush1.msra.mxu0 0.0
        %360 = vmatprep.subr.mxu0 0.0
        %361 = vmatpush1.msra.mxu0 0.0
        %362 = vmatprep.subr.mxu0 0.0
        %363 = vmatpush1.msra.mxu0 0.0
        %364 = vmatprep.subr.mxu0 0.0
        %365 = vmatpush1.msra.mxu0 0.0
        %366 = vmatprep.subr.mxu0 0.0
        %367 = vmatpush1.msra.mxu0 0.0
        %368 = vmatprep.subr.mxu0 0.0
        %369 = vmatpush1.msra.mxu0 0.0
        %370 = vmatprep.subr.mxu0 0.0
        %371 = vmatpush1.msra.mxu0 0.0
        %372 = vmatprep.subr.mxu0 0.0
        %373 = vmatpush1.msra.mxu0 0.0
        %374 = vmatprep.subr.mxu0 0.0
        %375 = vmatpush1.msra.mxu0 0.0
        %376 = vmatprep.subr.mxu0 0.0
        %377 = vmatpush1.msra.mxu0 0.0
        %378 = vmatprep.subr.mxu0 0.0
        %379 = vmatpush1.msra.mxu0 0.0
        %380 = vmatprep.subr.mxu0 0.0
        %381 = vmatpush1.msra.mxu0 0.0
        %382 = vmatprep.subr.mxu0 0.0
        %383 = vmatpush1.msra.mxu0 0.0
        %384 = vmatprep.subr.mxu0 0.0
        %385 = vmatpush1.msra.mxu0 0.0
        %386 = vmatprep.subr.mxu0 0.0
        %387 = vmatpush1.msra.mxu0 0.0
        %388 = vmatprep.subr.mxu0 0.0
        %389 = vmatpush1.msra.mxu0 0.0
        %390 = vmatprep.subr.mxu0 0.0
        %391 = vmatpush1.msra.mxu0 0.0
        %392 = vmatprep.subr.mxu0 0.0
        %393 = vmatpush1.msra.mxu0 0.0
        %394 = vmatprep.subr.mxu0 0.0
        %395 = vmatpush1.msra.mxu0 0.0
        %396 = vmatprep.subr.mxu0 0.0
        %397 = vmatpush1.msra.mxu0 0.0
        %398 = vmatprep.subr.mxu0 0.0
        %399 = vmatpush1.msra.mxu0 0.0
        %400 = vmatprep.subr.mxu0 0.0
        %401 = vmatpush1.msra.mxu0 0.0
        %402 = vmatprep.mubr.f32.mxu0 0.0
        %403 = vmatmul.mubr.f32.gmra.mrb[0].mxu0 %v336
        %v404 = vpop.f32.mrb[0].mxu0
        %v405 = vadd.f32 0.0, %v404
        %v406 = vpop.f32.mrb[0].mxu0
        %407 = vdwg.mxu0
        %408 = vmatprep.subr.mxu0 0.0
        %409 = vmatpush1.msra.mxu0 %v154
        %410 = vmatprep.subr.mxu0 0.0
        %411 = vmatpush1.msra.mxu0 %v155
        %412 = vmatprep.subr.mxu0 0.0
        %413 = vmatpush1.msra.mxu0 %v156
        %414 = vmatprep.subr.mxu0 0.0
        %415 = vmatpush1.msra.mxu0 %v157
        %416 = vmatprep.subr.mxu0 0.0
        %417 = vmatpush1.msra.mxu0 0.0
        %418 = vmatprep.subr.mxu0 0.0
        %419 = vmatpush1.msra.mxu0 0.0
        %420 = vmatprep.subr.mxu0 0.0
        %421 = vmatpush1.msra.mxu0 0.0
        %422 = vmatprep.subr.mxu0 0.0
        %423 = vmatpush1.msra.mxu0 0.0
        %424 = vmatprep.subr.mxu0 0.0
        %425 = vmatpush1.msra.mxu0 0.0
        %426 = vmatprep.subr.mxu0 0.0
        %427 = vmatpush1.msra.mxu0 0.0
        %428 = vmatprep.subr.mxu0 0.0
        %429 = vmatpush1.msra.mxu0 0.0
        %430 = vmatprep.subr.mxu0 0.0
        %431 = vmatpush1.msra.mxu0 0.0
        %432 = vmatprep.subr.mxu0 0.0
        %433 = vmatpush1.msra.mxu0 0.0
        %434 = vmatprep.subr.mxu0 0.0
        %435 = vmatpush1.msra.mxu0 0.0
        %436 = vmatprep.subr.mxu0 0.0
        %437 = vmatpush1.msra.mxu0 0.0
        %438 = vmatprep.subr.mxu0 0.0
        %439 = vmatpush1.msra.mxu0 0.0
        %440 = vmatprep.subr.mxu0 0.0
        %441 = vmatpush1.msra.mxu0 0.0
        %442 = vmatprep.subr.mxu0 0.0
        %443 = vmatpush1.msra.mxu0 0.0
        %444 = vmatprep.subr.mxu0 0.0
        %445 = vmatpush1.msra.mxu0 0.0
        %446 = vmatprep.subr.mxu0 0.0
        %447 = vmatpush1.msra.mxu0 0.0
        %448 = vmatprep.subr.mxu0 0.0
        %449 = vmatpush1.msra.mxu0 0.0
        %450 = vmatprep.subr.mxu0 0.0
        %451 = vmatpush1.msra.mxu0 0.0
        %452 = vmatprep.subr.mxu0 0.0
        %453 = vmatpush1.msra.mxu0 0.0
        %454 = vmatprep.subr.mxu0 0.0
        %455 = vmatpush1.msra.mxu0 0.0
        %456 = vmatprep.subr.mxu0 0.0
        %457 = vmatpush1.msra.mxu0 0.0
        %458 = vmatprep.subr.mxu0 0.0
        %459 = vmatpush1.msra.mxu0 0.0
        %460 = vmatprep.subr.mxu0 0.0
        %461 = vmatpush1.msra.mxu0 0.0
        %462 = vmatprep.subr.mxu0 0.0
        %463 = vmatpush1.msra.mxu0 0.0
        %464 = vmatprep.subr.mxu0 0.0
        %465 = vmatpush1.msra.mxu0 0.0
        %466 = vmatprep.subr.mxu0 0.0
        %467 = vmatpush1.msra.mxu0 0.0
        %468 = vmatprep.subr.mxu0 0.0
        %469 = vmatpush1.msra.mxu0 0.0
        %470 = vmatprep.subr.mxu0 0.0
        %471 = vmatpush1.msra.mxu0 0.0
        %472 = vmatprep.mubr.f32.mxu0 0.0
        %473 = vmatmul.mubr.f32.gmra.mrb[0].mxu0 %v336
        %v474 = vpop.f32.mrb[0].mxu0
        %v475 = vadd.f32 0.0, %v474
        %v476 = vpop.f32.mrb[0].mxu0
        %477 = vdwg.mxu0
        %479 = vrot.lane.b32.xlu0 %v405, 96
        %v480 = vpop.permute.xlu0 %479
        %v482 = vadd.f32 %v331, %v480
        %v483 = vxor.u32 %v482, 2147483648
        %v484 = vmul.f32 %v483, 1.442695
        %v485 = vpow.pop %v484
        %v486 = vadd.f32 %v485, 1.0
        %v487 = vrcp.pop %v486
        %v488 = vmul.f32 1.0, %v487
        %v489 = vadd.f32 %v333, %v475
        %v490 = vxor.u32 %v489, 2147483648
        %v491 = vmul.f32 %v490, 1.442695
        %v492 = vpow.pop %v491
        %v493 = vadd.f32 %v492, 1.0
        %v494 = vrcp.pop %v493
        %v495 = vmul.f32 1.0, %v494
        %496 = vmatprep.subr.mxu0 0.0
        %497 = vmatpush1.msra.mxu0 %v158
        %498 = vmatprep.subr.mxu0 0.0
        %499 = vmatpush1.msra.mxu0 %v159
        %500 = vmatprep.subr.mxu0 0.0
        %501 = vmatpush1.msra.mxu0 %v160
        %502 = vmatprep.subr.mxu0 0.0
        %503 = vmatpush1.msra.mxu0 %v161
        %504 = vmatprep.subr.mxu0 0.0
        %505 = vmatpush1.msra.mxu0 0.0
        %506 = vmatprep.subr.mxu0 0.0
        %507 = vmatpush1.msra.mxu0 0.0
        %508 = vmatprep.subr.mxu0 0.0
        %509 = vmatpush1.msra.mxu0 0.0
        %510 = vmatprep.subr.mxu0 0.0
        %511 = vmatpush1.msra.mxu0 0.0
        %512 = vmatprep.subr.mxu0 0.0
        %513 = vmatpush1.msra.mxu0 0.0
        %514 = vmatprep.subr.mxu0 0.0
        %515 = vmatpush1.msra.mxu0 0.0
        %516 = vmatprep.subr.mxu0 0.0
        %517 = vmatpush1.msra.mxu0 0.0
        %518 = vmatprep.subr.mxu0 0.0
        %519 = vmatpush1.msra.mxu0 0.0
        %520 = vmatprep.subr.mxu0 0.0
        %521 = vmatpush1.msra.mxu0 0.0
        %522 = vmatprep.subr.mxu0 0.0
        %523 = vmatpush1.msra.mxu0 0.0
        %524 = vmatprep.subr.mxu0 0.0
        %525 = vmatpush1.msra.mxu0 0.0
        %526 = vmatprep.subr.mxu0 0.0
        %527 = vmatpush1.msra.mxu0 0.0
        %528 = vmatprep.subr.mxu0 0.0
        %529 = vmatpush1.msra.mxu0 0.0
        %530 = vmatprep.subr.mxu0 0.0
        %531 = vmatpush1.msra.mxu0 0.0
        %532 = vmatprep.subr.mxu0 0.0
        %533 = vmatpush1.msra.mxu0 0.0
        %534 = vmatprep.subr.mxu0 0.0
        %535 = vmatpush1.msra.mxu0 0.0
        %536 = vmatprep.subr.mxu0 0.0
        %537 = vmatpush1.msra.mxu0 0.0
        %538 = vmatprep.subr.mxu0 0.0
        %539 = vmatpush1.msra.mxu0 0.0
        %540 = vmatprep.subr.mxu0 0.0
        %541 = vmatpush1.msra.mxu0 0.0
        %542 = vmatprep.subr.mxu0 0.0
        %543 = vmatpush1.msra.mxu0 0.0
        %544 = vmatprep.subr.mxu0 0.0
        %545 = vmatpush1.msra.mxu0 0.0
        %546 = vmatprep.subr.mxu0 0.0
        %547 = vmatpush1.msra.mxu0 0.0
        %548 = vmatprep.subr.mxu0 0.0
        %549 = vmatpush1.msra.mxu0 0.0
        %550 = vmatprep.subr.mxu0 0.0
        %551 = vmatpush1.msra.mxu0 0.0
        %552 = vmatprep.subr.mxu0 0.0
        %553 = vmatpush1.msra.mxu0 0.0
        %554 = vmatprep.subr.mxu0 0.0
        %555 = vmatpush1.msra.mxu0 0.0
        %556 = vmatprep.subr.mxu0 0.0
        %557 = vmatpush1.msra.mxu0 0.0
        %558 = vmatprep.subr.mxu0 0.0
        %559 = vmatpush1.msra.mxu0 0.0
        %560 = vmatprep.mubr.f32.mxu0 0.0
        %561 = vmatmul.mubr.f32.gmra.mrb[0].mxu0 %v336
        %v562 = vpop.f32.mrb[0].mxu0
        %v563 = vadd.f32 %v172, %v562
        %v564 = vpop.f32.mrb[0].mxu0
        %565 = vdwg.mxu0
        %567 = vrot.lane.b32.xlu0 %v563, 96
        %v568 = vpop.permute.xlu0 %567
        %v570 = vmul.f32 %v488, %v568
        %572 = vrot.lane.b32.xlu0 %v570, 64
        %v573 = vpop.permute.xlu0 %572
        %v575 = vadd.f32 %v333, %v573
        %v576 = vtanh.pop %v575
        %v577 = vsub.f32 1.0, %v495
        %579 = vrot.lane.b32.xlu0 %v576, 96
        %v580 = vpop.permute.xlu0 %579
        %v582 = vmul.f32 %v577, %v580
        %v583 = vmul.f32 %v495, 0.0
        %v584 = vadd.f32 %v582, %v583
        %vm585 = vcmask 253952
        %586 = vst.msk [vmem:[#allocation2] sm:$0x1] %vm585, %v584
        %v588 = vsel %vm176, %v584, 0
        %590 = vmatprep.subr.mxu0 0.0
        %591 = vmatpush1.msra.mxu0 %v150
        %592 = vmatprep.subr.mxu0 0.0
        %593 = vmatpush1.msra.mxu0 %v151
        %594 = vmatprep.subr.mxu0 0.0
        %595 = vmatpush1.msra.mxu0 %v152
        %596 = vmatprep.subr.mxu0 0.0
        %597 = vmatpush1.msra.mxu0 %v153
        %598 = vmatprep.subr.mxu0 0.0
        %599 = vmatpush1.msra.mxu0 0.0
        %600 = vmatprep.subr.mxu0 0.0
        %601 = vmatpush1.msra.mxu0 0.0
        %602 = vmatprep.subr.mxu0 0.0
        %603 = vmatpush1.msra.mxu0 0.0
        %604 = vmatprep.subr.mxu0 0.0
        %605 = vmatpush1.msra.mxu0 0.0
        %606 = vmatprep.subr.mxu0 0.0
        %607 = vmatpush1.msra.mxu0 0.0
        %608 = vmatprep.subr.mxu0 0.0
        %609 = vmatpush1.msra.mxu0 0.0
        %610 = vmatprep.subr.mxu0 0.0
        %611 = vmatpush1.msra.mxu0 0.0
        %612 = vmatprep.subr.mxu0 0.0
        %613 = vmatpush1.msra.mxu0 0.0
        %614 = vmatprep.subr.mxu0 0.0
        %615 = vmatpush1.msra.mxu0 0.0
        %616 = vmatprep.subr.mxu0 0.0
        %617 = vmatpush1.msra.mxu0 0.0
        %618 = vmatprep.subr.mxu0 0.0
        %619 = vmatpush1.msra.mxu0 0.0
        %620 = vmatprep.subr.mxu0 0.0
        %621 = vmatpush1.msra.mxu0 0.0
        %622 = vmatprep.subr.mxu0 0.0
        %623 = vmatpush1.msra.mxu0 0.0
        %624 = vmatprep.subr.mxu0 0.0
        %625 = vmatpush1.msra.mxu0 0.0
        %626 = vmatprep.subr.mxu0 0.0
        %627 = vmatpush1.msra.mxu0 0.0
        %628 = vmatprep.subr.mxu0 0.0
        %629 = vmatpush1.msra.mxu0 0.0
        %630 = vmatprep.subr.mxu0 0.0
        %631 = vmatpush1.msra.mxu0 0.0
        %632 = vmatprep.subr.mxu0 0.0
        %633 = vmatpush1.msra.mxu0 0.0
        %634 = vmatprep.subr.mxu0 0.0
        %635 = vmatpush1.msra.mxu0 0.0
        %636 = vmatprep.subr.mxu0 0.0
        %637 = vmatpush1.msra.mxu0 0.0
        %638 = vmatprep.subr.mxu0 0.0
        %639 = vmatpush1.msra.mxu0 0.0
        %640 = vmatprep.subr.mxu0 0.0
        %641 = vmatpush1.msra.mxu0 0.0
        %642 = vmatprep.subr.mxu0 0.0
        %643 = vmatpush1.msra.mxu0 0.0
        %644 = vmatprep.subr.mxu0 0.0
        %645 = vmatpush1.msra.mxu0 0.0
        %646 = vmatprep.subr.mxu0 0.0
        %647 = vmatpush1.msra.mxu0 0.0
        %648 = vmatprep.subr.mxu0 0.0
        %649 = vmatpush1.msra.mxu0 0.0
        %650 = vmatprep.subr.mxu0 0.0
        %651 = vmatpush1.msra.mxu0 0.0
        %652 = vmatprep.subr.mxu0 0.0
        %653 = vmatpush1.msra.mxu0 0.0
        %654 = vmatprep.mubr.f32.mxu0 0.0
        %655 = vmatmul.mubr.f32.gmra.mrb[0].mxu0 %v588
        %v656 = vpop.f32.mrb[0].mxu0
        %v657 = vadd.f32 0.0, %v656
        %v658 = vpop.f32.mrb[0].mxu0
        %659 = vdwg.mxu0
        %660 = vmatprep.subr.mxu0 0.0
        %661 = vmatpush1.msra.mxu0 %v154
        %662 = vmatprep.subr.mxu0 0.0
        %663 = vmatpush1.msra.mxu0 %v155
        %664 = vmatprep.subr.mxu0 0.0
        %665 = vmatpush1.msra.mxu0 %v156
        %666 = vmatprep.subr.mxu0 0.0
        %667 = vmatpush1.msra.mxu0 %v157
        %668 = vmatprep.subr.mxu0 0.0
        %669 = vmatpush1.msra.mxu0 0.0
        %670 = vmatprep.subr.mxu0 0.0
        %671 = vmatpush1.msra.mxu0 0.0
        %672 = vmatprep.subr.mxu0 0.0
        %673 = vmatpush1.msra.mxu0 0.0
        %674 = vmatprep.subr.mxu0 0.0
        %675 = vmatpush1.msra.mxu0 0.0
        %676 = vmatprep.subr.mxu0 0.0
        %677 = vmatpush1.msra.mxu0 0.0
        %678 = vmatprep.subr.mxu0 0.0
        %679 = vmatpush1.msra.mxu0 0.0
        %680 = vmatprep.subr.mxu0 0.0
        %681 = vmatpush1.msra.mxu0 0.0
        %682 = vmatprep.subr.mxu0 0.0
        %683 = vmatpush1.msra.mxu0 0.0
        %684 = vmatprep.subr.mxu0 0.0
        %685 = vmatpush1.msra.mxu0 0.0
        %686 = vmatprep.subr.mxu0 0.0
        %687 = vmatpush1.msra.mxu0 0.0
        %688 = vmatprep.subr.mxu0 0.0
        %689 = vmatpush1.msra.mxu0 0.0
        %690 = vmatprep.subr.mxu0 0.0
        %691 = vmatpush1.msra.mxu0 0.0
        %692 = vmatprep.subr.mxu0 0.0
        %693 = vmatpush1.msra.mxu0 0.0
        %694 = vmatprep.subr.mxu0 0.0
        %695 = vmatpush1.msra.mxu0 0.0
        %696 = vmatprep.subr.mxu0 0.0
        %697 = vmatpush1.msra.mxu0 0.0
        %698 = vmatprep.subr.mxu0 0.0
        %699 = vmatpush1.msra.mxu0 0.0
        %700 = vmatprep.subr.mxu0 0.0
        %701 = vmatpush1.msra.mxu0 0.0
        %702 = vmatprep.subr.mxu0 0.0
        %703 = vmatpush1.msra.mxu0 0.0
        %704 = vmatprep.subr.mxu0 0.0
        %705 = vmatpush1.msra.mxu0 0.0
        %706 = vmatprep.subr.mxu0 0.0
        %707 = vmatpush1.msra.mxu0 0.0
        %708 = vmatprep.subr.mxu0 0.0
        %709 = vmatpush1.msra.mxu0 0.0
        %710 = vmatprep.subr.mxu0 0.0
        %711 = vmatpush1.msra.mxu0 0.0
        %712 = vmatprep.subr.mxu0 0.0
        %713 = vmatpush1.msra.mxu0 0.0
        %714 = vmatprep.subr.mxu0 0.0
        %715 = vmatpush1.msra.mxu0 0.0
        %716 = vmatprep.subr.mxu0 0.0
        %717 = vmatpush1.msra.mxu0 0.0
        %718 = vmatprep.subr.mxu0 0.0
        %719 = vmatpush1.msra.mxu0 0.0
        %720 = vmatprep.subr.mxu0 0.0
        %721 = vmatpush1.msra.mxu0 0.0
        %722 = vmatprep.subr.mxu0 0.0
        %723 = vmatpush1.msra.mxu0 0.0
        %724 = vmatprep.mubr.f32.mxu0 0.0
        %725 = vmatmul.mubr.f32.gmra.mrb[0].mxu0 %v588
        %v726 = vpop.f32.mrb[0].mxu0
        %v727 = vadd.f32 0.0, %v726
        %v728 = vpop.f32.mrb[0].mxu0
        %729 = vdwg.mxu0
        %v731 = vrot.slane %v657, 7
        %732 = vrot.lane.b32.xlu0 %v731, 96
        %v733 = vpop.permute.xlu0 %732
        %v735 = vadd.f32 %v331, %v733
        %v736 = vxor.u32 %v735, 2147483648
        %v737 = vmul.f32 %v736, 1.442695
        %v738 = vpow.pop %v737
        %v739 = vadd.f32 %v738, 1.0
        %v740 = vrcp.pop %v739
        %v741 = vmul.f32 1.0, %v740
        %v743 = vrot.slane %v727, 7
        %v745 = vadd.f32 %v333, %v743
        %v746 = vxor.u32 %v745, 2147483648
        %v747 = vmul.f32 %v746, 1.442695
        %v748 = vpow.pop %v747
        %v749 = vadd.f32 %v748, 1.0
        %v750 = vrcp.pop %v749
        %v751 = vmul.f32 1.0, %v750
        %752 = vmatprep.subr.mxu0 0.0
        %753 = vmatpush1.msra.mxu0 %v158
        %754 = vmatprep.subr.mxu0 0.0
        %755 = vmatpush1.msra.mxu0 %v159
        %756 = vmatprep.subr.mxu0 0.0
        %757 = vmatpush1.msra.mxu0 %v160
        %758 = vmatprep.subr.mxu0 0.0
        %759 = vmatpush1.msra.mxu0 %v161
        %760 = vmatprep.subr.mxu0 0.0
        %761 = vmatpush1.msra.mxu0 0.0
        %762 = vmatprep.subr.mxu0 0.0
        %763 = vmatpush1.msra.mxu0 0.0
        %764 = vmatprep.subr.mxu0 0.0
        %765 = vmatpush1.msra.mxu0 0.0
        %766 = vmatprep.subr.mxu0 0.0
        %767 = vmatpush1.msra.mxu0 0.0
        %768 = vmatprep.subr.mxu0 0.0
        %769 = vmatpush1.msra.mxu0 0.0
        %770 = vmatprep.subr.mxu0 0.0
        %771 = vmatpush1.msra.mxu0 0.0
        %772 = vmatprep.subr.mxu0 0.0
        %773 = vmatpush1.msra.mxu0 0.0
        %774 = vmatprep.subr.mxu0 0.0
        %775 = vmatpush1.msra.mxu0 0.0
        %776 = vmatprep.subr.mxu0 0.0
        %777 = vmatpush1.msra.mxu0 0.0
        %778 = vmatprep.subr.mxu0 0.0
        %779 = vmatpush1.msra.mxu0 0.0
        %780 = vmatprep.subr.mxu0 0.0
        %781 = vmatpush1.msra.mxu0 0.0
        %782 = vmatprep.subr.mxu0 0.0
        %783 = vmatpush1.msra.mxu0 0.0
        %784 = vmatprep.subr.mxu0 0.0
        %785 = vmatpush1.msra.mxu0 0.0
        %786 = vmatprep.subr.mxu0 0.0
        %787 = vmatpush1.msra.mxu0 0.0
        %788 = vmatprep.subr.mxu0 0.0
        %789 = vmatpush1.msra.mxu0 0.0
        %790 = vmatprep.subr.mxu0 0.0
        %791 = vmatpush1.msra.mxu0 0.0
        %792 = vmatprep.subr.mxu0 0.0
        %793 = vmatpush1.msra.mxu0 0.0
        %794 = vmatprep.subr.mxu0 0.0
        %795 = vmatpush1.msra.mxu0 0.0
        %796 = vmatprep.subr.mxu0 0.0
        %797 = vmatpush1.msra.mxu0 0.0
        %798 = vmatprep.subr.mxu0 0.0
        %799 = vmatpush1.msra.mxu0 0.0
        %800 = vmatprep.subr.mxu0 0.0
        %801 = vmatpush1.msra.mxu0 0.0
        %802 = vmatprep.subr.mxu0 0.0
        %803 = vmatpush1.msra.mxu0 0.0
        %804 = vmatprep.subr.mxu0 0.0
        %805 = vmatpush1.msra.mxu0 0.0
        %806 = vmatprep.subr.mxu0 0.0
        %807 = vmatpush1.msra.mxu0 0.0
        %808 = vmatprep.subr.mxu0 0.0
        %809 = vmatpush1.msra.mxu0 0.0
        %810 = vmatprep.subr.mxu0 0.0
        %811 = vmatpush1.msra.mxu0 0.0
        %812 = vmatprep.subr.mxu0 0.0
        %813 = vmatpush1.msra.mxu0 0.0
        %814 = vmatprep.subr.mxu0 0.0
        %815 = vmatpush1.msra.mxu0 0.0
        %816 = vmatprep.mubr.f32.mxu0 0.0
        %817 = vmatmul.mubr.f32.gmra.mrb[0].mxu0 %v588
        %v818 = vpop.f32.mrb[0].mxu0
        %v819 = vadd.f32 %v172, %v818
        %v820 = vpop.f32.mrb[0].mxu0
        %821 = vdwg.mxu0
        %v823 = vrot.slane %v819, 7
        %824 = vrot.lane.b32.xlu0 %v823, 96
        %v825 = vpop.permute.xlu0 %824
        %v827 = vmul.f32 %v741, %v825
        %829 = vrot.lane.b32.xlu0 %v827, 64
        %v830 = vpop.permute.xlu0 %829
        %v832 = vadd.f32 %v333, %v830
        %v833 = vtanh.pop %v832
        %v834 = vsub.f32 1.0, %v751
        %836 = vrot.lane.b32.xlu0 %v833, 96
        %v837 = vpop.permute.xlu0 %836
        %v839 = vmul.f32 %v834, %v837
        %v840 = vrot.slane %v584, 7
        %v842 = vmul.f32 %v751, %v840
        %v843 = vadd.f32 %v839, %v842
        %vm844 = vcmask 254977
        %845 = vst.msk [vmem:[#allocation2] sm:$0x2] %vm844, %v843
        %v847 = vrot.slane %v843, 1
        %v848 = vsel %vm176, %v847, 0
        %850 = vmatprep.subr.mxu0 0.0
        %851 = vmatpush1.msra.mxu0 %v150
        %852 = vmatprep.subr.mxu0 0.0
        %853 = vmatpush1.msra.mxu0 %v151
        %854 = vmatprep.subr.mxu0 0.0
        %855 = vmatpush1.msra.mxu0 %v152
        %856 = vmatprep.subr.mxu0 0.0
        %857 = vmatpush1.msra.mxu0 %v153
        %858 = vmatprep.subr.mxu0 0.0
        %859 = vmatpush1.msra.mxu0 0.0
        %860 = vmatprep.subr.mxu0 0.0
        %861 = vmatpush1.msra.mxu0 0.0
        %862 = vmatprep.subr.mxu0 0.0
        %863 = vmatpush1.msra.mxu0 0.0
        %864 = vmatprep.subr.mxu0 0.0
        %865 = vmatpush1.msra.mxu0 0.0
        %866 = vmatprep.subr.mxu0 0.0
        %867 = vmatpush1.msra.mxu0 0.0
        %868 = vmatprep.subr.mxu0 0.0
        %869 = vmatpush1.msra.mxu0 0.0
        %870 = vmatprep.subr.mxu0 0.0
        %871 = vmatpush1.msra.mxu0 0.0
        %872 = vmatprep.subr.mxu0 0.0
        %873 = vmatpush1.msra.mxu0 0.0
        %874 = vmatprep.subr.mxu0 0.0
        %875 = vmatpush1.msra.mxu0 0.0
        %876 = vmatprep.subr.mxu0 0.0
        %877 = vmatpush1.msra.mxu0 0.0
        %878 = vmatprep.subr.mxu0 0.0
        %879 = vmatpush1.msra.mxu0 0.0
        %880 = vmatprep.subr.mxu0 0.0
        %881 = vmatpush1.msra.mxu0 0.0
        %882 = vmatprep.subr.mxu0 0.0
        %883 = vmatpush1.msra.mxu0 0.0
        %884 = vmatprep.subr.mxu0 0.0
        %885 = vmatpush1.msra.mxu0 0.0
        %886 = vmatprep.subr.mxu0 0.0
        %887 = vmatpush1.msra.mxu0 0.0
        %888 = vmatprep.subr.mxu0 0.0
        %889 = vmatpush1.msra.mxu0 0.0
        %890 = vmatprep.subr.mxu0 0.0
        %891 = vmatpush1.msra.mxu0 0.0
        %892 = vmatprep.subr.mxu0 0.0
        %893 = vmatpush1.msra.mxu0 0.0
        %894 = vmatprep.subr.mxu0 0.0
        %895 = vmatpush1.msra.mxu0 0.0
        %896 = vmatprep.subr.mxu0 0.0
        %897 = vmatpush1.msra.mxu0 0.0
        %898 = vmatprep.subr.mxu0 0.0
        %899 = vmatpush1.msra.mxu0 0.0
        %900 = vmatprep.subr.mxu0 0.0
        %901 = vmatpush1.msra.mxu0 0.0
        %902 = vmatprep.subr.mxu0 0.0
        %903 = vmatpush1.msra.mxu0 0.0
        %904 = vmatprep.subr.mxu0 0.0
        %905 = vmatpush1.msra.mxu0 0.0
        %906 = vmatprep.subr.mxu0 0.0
        %907 = vmatpush1.msra.mxu0 0.0
        %908 = vmatprep.subr.mxu0 0.0
        %909 = vmatpush1.msra.mxu0 0.0
        %910 = vmatprep.subr.mxu0 0.0
        %911 = vmatpush1.msra.mxu0 0.0
        %912 = vmatprep.subr.mxu0 0.0
        %913 = vmatpush1.msra.mxu0 0.0
        %914 = vmatprep.mubr.f32.mxu0 0.0
        %915 = vmatmul.mubr.f32.gmra.mrb[0].mxu0 %v848
        %v916 = vpop.f32.mrb[0].mxu0
        %v917 = vadd.f32 0.0, %v916
        %v918 = vpop.f32.mrb[0].mxu0
        %919 = vdwg.mxu0
        %920 = vmatprep.subr.mxu0 0.0
        %921 = vmatpush1.msra.mxu0 %v154
        %922 = vmatprep.subr.mxu0 0.0
        %923 = vmatpush1.msra.mxu0 %v155
        %924 = vmatprep.subr.mxu0 0.0
        %925 = vmatpush1.msra.mxu0 %v156
        %926 = vmatprep.subr.mxu0 0.0
        %927 = vmatpush1.msra.mxu0 %v157
        %928 = vmatprep.subr.mxu0 0.0
        %929 = vmatpush1.msra.mxu0 0.0
        %930 = vmatprep.subr.mxu0 0.0
        %931 = vmatpush1.msra.mxu0 0.0
        %932 = vmatprep.subr.mxu0 0.0
        %933 = vmatpush1.msra.mxu0 0.0
        %934 = vmatprep.subr.mxu0 0.0
        %935 = vmatpush1.msra.mxu0 0.0
        %936 = vmatprep.subr.mxu0 0.0
        %937 = vmatpush1.msra.mxu0 0.0
        %938 = vmatprep.subr.mxu0 0.0
        %939 = vmatpush1.msra.mxu0 0.0
        %940 = vmatprep.subr.mxu0 0.0
        %941 = vmatpush1.msra.mxu0 0.0
        %942 = vmatprep.subr.mxu0 0.0
        %943 = vmatpush1.msra.mxu0 0.0
        %944 = vmatprep.subr.mxu0 0.0
        %945 = vmatpush1.msra.mxu0 0.0
        %946 = vmatprep.subr.mxu0 0.0
        %947 = vmatpush1.msra.mxu0 0.0
        %948 = vmatprep.subr.mxu0 0.0
        %949 = vmatpush1.msra.mxu0 0.0
        %950 = vmatprep.subr.mxu0 0.0
        %951 = vmatpush1.msra.mxu0 0.0
        %952 = vmatprep.subr.mxu0 0.0
        %953 = vmatpush1.msra.mxu0 0.0
        %954 = vmatprep.subr.mxu0 0.0
        %955 = vmatpush1.msra.mxu0 0.0
        %956 = vmatprep.subr.mxu0 0.0
        %957 = vmatpush1.msra.mxu0 0.0
        %958 = vmatprep.subr.mxu0 0.0
        %959 = vmatpush1.msra.mxu0 0.0
        %960 = vmatprep.subr.mxu0 0.0
        %961 = vmatpush1.msra.mxu0 0.0
        %962 = vmatprep.subr.mxu0 0.0
        %963 = vmatpush1.msra.mxu0 0.0
        %964 = vmatprep.subr.mxu0 0.0
        %965 = vmatpush1.msra.mxu0 0.0
        %966 = vmatprep.subr.mxu0 0.0
        %967 = vmatpush1.msra.mxu0 0.0
        %968 = vmatprep.subr.mxu0 0.0
        %969 = vmatpush1.msra.mxu0 0.0
        %970 = vmatprep.subr.mxu0 0.0
        %971 = vmatpush1.msra.mxu0 0.0
        %972 = vmatprep.subr.mxu0 0.0
        %973 = vmatpush1.msra.mxu0 0.0
        %974 = vmatprep.subr.mxu0 0.0
        %975 = vmatpush1.msra.mxu0 0.0
        %976 = vmatprep.subr.mxu0 0.0
        %977 = vmatpush1.msra.mxu0 0.0
        %978 = vmatprep.subr.mxu0 0.0
        %979 = vmatpush1.msra.mxu0 0.0
        %980 = vmatprep.subr.mxu0 0.0
        %981 = vmatpush1.msra.mxu0 0.0
        %982 = vmatprep.subr.mxu0 0.0
        %983 = vmatpush1.msra.mxu0 0.0
        %984 = vmatprep.mubr.f32.mxu0 0.0
        %985 = vmatmul.mubr.f32.gmra.mrb[0].mxu0 %v848
        %v986 = vpop.f32.mrb[0].mxu0
        %v987 = vadd.f32 0.0, %v986
        %v988 = vpop.f32.mrb[0].mxu0
        %989 = vdwg.mxu0
        %v991 = vrot.slane %v917, 6
        %992 = vrot.lane.b32.xlu0 %v991, 96
        %v993 = vpop.permute.xlu0 %992
        %v995 = vadd.f32 %v331, %v993
        %v996 = vxor.u32 %v995, 2147483648
        %v997 = vmul.f32 %v996, 1.442695
        %v998 = vpow.pop %v997
        %v999 = vadd.f32 %v998, 1.0
        %v1000 = vrcp.pop %v999
        %v1001 = vmul.f32 1.0, %v1000
        %v1003 = vrot.slane %v987, 6
        %v1005 = vadd.f32 %v333, %v1003
        %v1006 = vxor.u32 %v1005, 2147483648
        %v1007 = vmul.f32 %v1006, 1.442695
        %v1008 = vpow.pop %v1007
        %v1009 = vadd.f32 %v1008, 1.0
        %v1010 = vrcp.pop %v1009
        %v1011 = vmul.f32 1.0, %v1010
        %1012 = vmatprep.subr.mxu0 0.0
        %1013 = vmatpush1.msra.mxu0 %v158
        %1014 = vmatprep.subr.mxu0 0.0
        %1015 = vmatpush1.msra.mxu0 %v159
        %1016 = vmatprep.subr.mxu0 0.0
        %1017 = vmatpush1.msra.mxu0 %v160
        %1018 = vmatprep.subr.mxu0 0.0
        %1019 = vmatpush1.msra.mxu0 %v161
        %1020 = vmatprep.subr.mxu0 0.0
        %1021 = vmatpush1.msra.mxu0 0.0
        %1022 = vmatprep.subr.mxu0 0.0
        %1023 = vmatpush1.msra.mxu0 0.0
        %1024 = vmatprep.subr.mxu0 0.0
        %1025 = vmatpush1.msra.mxu0 0.0
        %1026 = vmatprep.subr.mxu0 0.0
        %1027 = vmatpush1.msra.mxu0 0.0
        %1028 = vmatprep.subr.mxu0 0.0
        %1029 = vmatpush1.msra.mxu0 0.0
        %1030 = vmatprep.subr.mxu0 0.0
        %1031 = vmatpush1.msra.mxu0 0.0
        %1032 = vmatprep.subr.mxu0 0.0
        %1033 = vmatpush1.msra.mxu0 0.0
        %1034 = vmatprep.subr.mxu0 0.0
        %1035 = vmatpush1.msra.mxu0 0.0
        %1036 = vmatprep.subr.mxu0 0.0
        %1037 = vmatpush1.msra.mxu0 0.0
        %1038 = vmatprep.subr.mxu0 0.0
        %1039 = vmatpush1.msra.mxu0 0.0
        %1040 = vmatprep.subr.mxu0 0.0
        %1041 = vmatpush1.msra.mxu0 0.0
        %1042 = vmatprep.subr.mxu0 0.0
        %1043 = vmatpush1.msra.mxu0 0.0
        %1044 = vmatprep.subr.mxu0 0.0
        %1045 = vmatpush1.msra.mxu0 0.0
        %1046 = vmatprep.subr.mxu0 0.0
        %1047 = vmatpush1.msra.mxu0 0.0
        %1048 = vmatprep.subr.mxu0 0.0
        %1049 = vmatpush1.msra.mxu0 0.0
        %1050 = vmatprep.subr.mxu0 0.0
        %1051 = vmatpush1.msra.mxu0 0.0
        %1052 = vmatprep.subr.mxu0 0.0
        %1053 = vmatpush1.msra.mxu0 0.0
        %1054 = vmatprep.subr.mxu0 0.0
        %1055 = vmatpush1.msra.mxu0 0.0
        %1056 = vmatprep.subr.mxu0 0.0
        %1057 = vmatpush1.msra.mxu0 0.0
        %1058 = vmatprep.subr.mxu0 0.0
        %1059 = vmatpush1.msra.mxu0 0.0
        %1060 = vmatprep.subr.mxu0 0.0
        %1061 = vmatpush1.msra.mxu0 0.0
        %1062 = vmatprep.subr.mxu0 0.0
        %1063 = vmatpush1.msra.mxu0 0.0
        %1064 = vmatprep.subr.mxu0 0.0
        %1065 = vmatpush1.msra.mxu0 0.0
        %1066 = vmatprep.subr.mxu0 0.0
        %1067 = vmatpush1.msra.mxu0 0.0
        %1068 = vmatprep.subr.mxu0 0.0
        %1069 = vmatpush1.msra.mxu0 0.0
        %1070 = vmatprep.subr.mxu0 0.0
        %1071 = vmatpush1.msra.mxu0 0.0
        %1072 = vmatprep.subr.mxu0 0.0
        %1073 = vmatpush1.msra.mxu0 0.0
        %1074 = vmatprep.subr.mxu0 0.0
        %1075 = vmatpush1.msra.mxu0 0.0
        %1076 = vmatprep.mubr.f32.mxu0 0.0
        %1077 = vmatmul.mubr.f32.gmra.mrb[0].mxu0 %v848
        %v1078 = vpop.f32.mrb[0].mxu0
        %v1079 = vadd.f32 %v172, %v1078
        %v1080 = vpop.f32.mrb[0].mxu0
        %1081 = vdwg.mxu0
        %v1083 = vrot.slane %v1079, 6
        %1084 = vrot.lane.b32.xlu0 %v1083, 96
        %v1085 = vpop.permute.xlu0 %1084
        %v1087 = vmul.f32 %v1001, %v1085
        %1089 = vrot.lane.b32.xlu0 %v1087, 64
        %v1090 = vpop.permute.xlu0 %1089
        %v1092 = vadd.f32 %v333, %v1090
        %v1093 = vtanh.pop %v1092
        %v1094 = vsub.f32 1.0, %v1011
        %1096 = vrot.lane.b32.xlu0 %v1093, 96
        %v1097 = vpop.permute.xlu0 %1096
        %v1099 = vmul.f32 %v1094, %v1097
        %v1100 = vrot.slane %v843, 7
        %v1102 = vmul.f32 %v1011, %v1100
        %v1103 = vadd.f32 %v1099, %v1102
        %vm1104 = vcmask 256002
        %1105 = vst.msk [vmem:[#allocation2] sm:$0x4] %vm1104, %v1103
        %v1107 = vrot.slane %v1103, 2
        %v1108 = vsel %vm176, %v1107, 0
        %1110 = vmatprep.subr.mxu0 0.0
        %1111 = vmatpush1.msra.mxu0 %v150
        %1112 = vmatprep.subr.mxu0 0.0
        %1113 = vmatpush1.msra.mxu0 %v151
        %1114 = vmatprep.subr.mxu0 0.0
        %1115 = vmatpush1.msra.mxu0 %v152
        %1116 = vmatprep.subr.mxu0 0.0
        %1117 = vmatpush1.msra.mxu0 %v153
        %1118 = vmatprep.subr.mxu0 0.0
        %1119 = vmatpush1.msra.mxu0 0.0
        %1120 = vmatprep.subr.mxu0 0.0
        %1121 = vmatpush1.msra.mxu0 0.0
        %1122 = vmatprep.subr.mxu0 0.0
        %1123 = vmatpush1.msra.mxu0 0.0
        %1124 = vmatprep.subr.mxu0 0.0
        %1125 = vmatpush1.msra.mxu0 0.0
        %1126 = vmatprep.subr.mxu0 0.0
        %1127 = vmatpush1.msra.mxu0 0.0
        %1128 = vmatprep.subr.mxu0 0.0
        %1129 = vmatpush1.msra.mxu0 0.0
        %1130 = vmatprep.subr.mxu0 0.0
        %1131 = vmatpush1.msra.mxu0 0.0
        %1132 = vmatprep.subr.mxu0 0.0
        %1133 = vmatpush1.msra.mxu0 0.0
        %1134 = vmatprep.subr.mxu0 0.0
        %1135 = vmatpush1.msra.mxu0 0.0
        %1136 = vmatprep.subr.mxu0 0.0
        %1137 = vmatpush1.msra.mxu0 0.0
        %1138 = vmatprep.subr.mxu0 0.0
        %1139 = vmatpush1.msra.mxu0 0.0
        %1140 = vmatprep.subr.mxu0 0.0
        %1141 = vmatpush1.msra.mxu0 0.0
        %1142 = vmatprep.subr.mxu0 0.0
        %1143 = vmatpush1.msra.mxu0 0.0
        %1144 = vmatprep.subr.mxu0 0.0
        %1145 = vmatpush1.msra.mxu0 0.0
        %1146 = vmatprep.subr.mxu0 0.0
        %1147 = vmatpush1.msra.mxu0 0.0
        %1148 = vmatprep.subr.mxu0 0.0
        %1149 = vmatpush1.msra.mxu0 0.0
        %1150 = vmatprep.subr.mxu0 0.0
        %1151 = vmatpush1.msra.mxu0 0.0
        %1152 = vmatprep.subr.mxu0 0.0
        %1153 = vmatpush1.msra.mxu0 0.0
        %1154 = vmatprep.subr.mxu0 0.0
        %1155 = vmatpush1.msra.mxu0 0.0
        %1156 = vmatprep.subr.mxu0 0.0
        %1157 = vmatpush1.msra.mxu0 0.0
        %1158 = vmatprep.subr.mxu0 0.0
        %1159 = vmatpush1.msra.mxu0 0.0
        %1160 = vmatprep.subr.mxu0 0.0
        %1161 = vmatpush1.msra.mxu0 0.0
        %1162 = vmatprep.subr.mxu0 0.0
        %1163 = vmatpush1.msra.mxu0 0.0
        %1164 = vmatprep.subr.mxu0 0.0
        %1165 = vmatpush1.msra.mxu0 0.0
        %1166 = vmatprep.subr.mxu0 0.0
        %1167 = vmatpush1.msra.mxu0 0.0
        %1168 = vmatprep.subr.mxu0 0.0
        %1169 = vmatpush1.msra.mxu0 0.0
        %1170 = vmatprep.subr.mxu0 0.0
        %1171 = vmatpush1.msra.mxu0 0.0
        %1172 = vmatprep.subr.mxu0 0.0
        %1173 = vmatpush1.msra.mxu0 0.0
        %1174 = vmatprep.mubr.f32.mxu0 0.0
        %1175 = vmatmul.mubr.f32.gmra.mrb[0].mxu0 %v1108
        %v1176 = vpop.f32.mrb[0].mxu0
        %v1177 = vadd.f32 0.0, %v1176
        %v1178 = vpop.f32.mrb[0].mxu0
        %1179 = vdwg.mxu0
        %1180 = vmatprep.subr.mxu0 0.0
        %1181 = vmatpush1.msra.mxu0 %v154
        %1182 = vmatprep.subr.mxu0 0.0
        %1183 = vmatpush1.msra.mxu0 %v155
        %1184 = vmatprep.subr.mxu0 0.0
        %1185 = vmatpush1.msra.mxu0 %v156
        %1186 = vmatprep.subr.mxu0 0.0
        %1187 = vmatpush1.msra.mxu0 %v157
        %1188 = vmatprep.subr.mxu0 0.0
        %1189 = vmatpush1.msra.mxu0 0.0
        %1190 = vmatprep.subr.mxu0 0.0
        %1191 = vmatpush1.msra.mxu0 0.0
        %1192 = vmatprep.subr.mxu0 0.0
        %1193 = vmatpush1.msra.mxu0 0.0
        %1194 = vmatprep.subr.mxu0 0.0
        %1195 = vmatpush1.msra.mxu0 0.0
        %1196 = vmatprep.subr.mxu0 0.0
        %1197 = vmatpush1.msra.mxu0 0.0
        %1198 = vmatprep.subr.mxu0 0.0
        %1199 = vmatpush1.msra.mxu0 0.0
        %1200 = vmatprep.subr.mxu0 0.0
        %1201 = vmatpush1.msra.mxu0 0.0
        %1202 = vmatprep.subr.mxu0 0.0
        %1203 = vmatpush1.msra.mxu0 0.0
        %1204 = vmatprep.subr.mxu0 0.0
        %1205 = vmatpush1.msra.mxu0 0.0
        %1206 = vmatprep.subr.mxu0 0.0
        %1207 = vmatpush1.msra.mxu0 0.0
        %1208 = vmatprep.subr.mxu0 0.0
        %1209 = vmatpush1.msra.mxu0 0.0
        %1210 = vmatprep.subr.mxu0 0.0
        %1211 = vmatpush1.msra.mxu0 0.0
        %1212 = vmatprep.subr.mxu0 0.0
        %1213 = vmatpush1.msra.mxu0 0.0
        %1214 = vmatprep.subr.mxu0 0.0
        %1215 = vmatpush1.msra.mxu0 0.0
        %1216 = vmatprep.subr.mxu0 0.0
        %1217 = vmatpush1.msra.mxu0 0.0
        %1218 = vmatprep.subr.mxu0 0.0
        %1219 = vmatpush1.msra.mxu0 0.0
        %1220 = vmatprep.subr.mxu0 0.0
        %1221 = vmatpush1.msra.mxu0 0.0
        %1222 = vmatprep.subr.mxu0 0.0
        %1223 = vmatpush1.msra.mxu0 0.0
        %1224 = vmatprep.subr.mxu0 0.0
        %1225 = vmatpush1.msra.mxu0 0.0
        %1226 = vmatprep.subr.mxu0 0.0
        %1227 = vmatpush1.msra.mxu0 0.0
        %1228 = vmatprep.subr.mxu0 0.0
        %1229 = vmatpush1.msra.mxu0 0.0
        %1230 = vmatprep.subr.mxu0 0.0
        %1231 = vmatpush1.msra.mxu0 0.0
        %1232 = vmatprep.subr.mxu0 0.0
        %1233 = vmatpush1.msra.mxu0 0.0
        %1234 = vmatprep.subr.mxu0 0.0
        %1235 = vmatpush1.msra.mxu0 0.0
        %1236 = vmatprep.subr.mxu0 0.0
        %1237 = vmatpush1.msra.mxu0 0.0
        %1238 = vmatprep.subr.mxu0 0.0
        %1239 = vmatpush1.msra.mxu0 0.0
        %1240 = vmatprep.subr.mxu0 0.0
        %1241 = vmatpush1.msra.mxu0 0.0
        %1242 = vmatprep.subr.mxu0 0.0
        %1243 = vmatpush1.msra.mxu0 0.0
        %1244 = vmatprep.mubr.f32.mxu0 0.0
        %1245 = vmatmul.mubr.f32.gmra.mrb[0].mxu0 %v1108
        %v1246 = vpop.f32.mrb[0].mxu0
        %v1247 = vadd.f32 0.0, %v1246
        %v1248 = vpop.f32.mrb[0].mxu0
        %1249 = vdwg.mxu0
        %v1251 = vrot.slane %v1177, 5
        %1252 = vrot.lane.b32.xlu0 %v1251, 96
        %v1253 = vpop.permute.xlu0 %1252
        %v1255 = vadd.f32 %v331, %v1253
        %v1256 = vxor.u32 %v1255, 2147483648
        %v1257 = vmul.f32 %v1256, 1.442695
        %v1258 = vpow.pop %v1257
        %v1259 = vadd.f32 %v1258, 1.0
        %v1260 = vrcp.pop %v1259
        %v1261 = vmul.f32 1.0, %v1260
        %v1263 = vrot.slane %v1247, 5
        %v1265 = vadd.f32 %v333, %v1263
        %v1266 = vxor.u32 %v1265, 2147483648
        %v1267 = vmul.f32 %v1266, 1.442695
        %v1268 = vpow.pop %v1267
        %v1269 = vadd.f32 %v1268, 1.0
        %v1270 = vrcp.pop %v1269
        %v1271 = vmul.f32 1.0, %v1270
        %1272 = vmatprep.subr.mxu0 0.0
        %1273 = vmatpush1.msra.mxu0 %v158
        %1274 = vmatprep.subr.mxu0 0.0
        %1275 = vmatpush1.msra.mxu0 %v159
        %1276 = vmatprep.subr.mxu0 0.0
        %1277 = vmatpush1.msra.mxu0 %v160
        %1278 = vmatprep.subr.mxu0 0.0
        %1279 = vmatpush1.msra.mxu0 %v161
        %1280 = vmatprep.subr.mxu0 0.0
        %1281 = vmatpush1.msra.mxu0 0.0
        %1282 = vmatprep.subr.mxu0 0.0
        %1283 = vmatpush1.msra.mxu0 0.0
        %1284 = vmatprep.subr.mxu0 0.0
        %1285 = vmatpush1.msra.mxu0 0.0
        %1286 = vmatprep.subr.mxu0 0.0
        %1287 = vmatpush1.msra.mxu0 0.0
        %1288 = vmatprep.subr.mxu0 0.0
        %1289 = vmatpush1.msra.mxu0 0.0
        %1290 = vmatprep.subr.mxu0 0.0
        %1291 = vmatpush1.msra.mxu0 0.0
        %1292 = vmatprep.subr.mxu0 0.0
        %1293 = vmatpush1.msra.mxu0 0.0
        %1294 = vmatprep.subr.mxu0 0.0
        %1295 = vmatpush1.msra.mxu0 0.0
        %1296 = vmatprep.subr.mxu0 0.0
        %1297 = vmatpush1.msra.mxu0 0.0
        %1298 = vmatprep.subr.mxu0 0.0
        %1299 = vmatpush1.msra.mxu0 0.0
        %1300 = vmatprep.subr.mxu0 0.0
        %1301 = vmatpush1.msra.mxu0 0.0
        %1302 = vmatprep.subr.mxu0 0.0
        %1303 = vmatpush1.msra.mxu0 0.0
        %1304 = vmatprep.subr.mxu0 0.0
        %1305 = vmatpush1.msra.mxu0 0.0
        %1306 = vmatprep.subr.mxu0 0.0
        %1307 = vmatpush1.msra.mxu0 0.0
        %1308 = vmatprep.subr.mxu0 0.0
        %1309 = vmatpush1.msra.mxu0 0.0
        %1310 = vmatprep.subr.mxu0 0.0
        %1311 = vmatpush1.msra.mxu0 0.0
        %1312 = vmatprep.subr.mxu0 0.0
        %1313 = vmatpush1.msra.mxu0 0.0
        %1314 = vmatprep.subr.mxu0 0.0
        %1315 = vmatpush1.msra.mxu0 0.0
        %1316 = vmatprep.subr.mxu0 0.0
        %1317 = vmatpush1.msra.mxu0 0.0
        %1318 = vmatprep.subr.mxu0 0.0
        %1319 = vmatpush1.msra.mxu0 0.0
        %1320 = vmatprep.subr.mxu0 0.0
        %1321 = vmatpush1.msra.mxu0 0.0
        %1322 = vmatprep.subr.mxu0 0.0
        %1323 = vmatpush1.msra.mxu0 0.0
        %1324 = vmatprep.subr.mxu0 0.0
        %1325 = vmatpush1.msra.mxu0 0.0
        %1326 = vmatprep.subr.mxu0 0.0
        %1327 = vmatpush1.msra.mxu0 0.0
        %1328 = vmatprep.subr.mxu0 0.0
        %1329 = vmatpush1.msra.mxu0 0.0
        %1330 = vmatprep.subr.mxu0 0.0
        %1331 = vmatpush1.msra.mxu0 0.0
        %1332 = vmatprep.subr.mxu0 0.0
        %1333 = vmatpush1.msra.mxu0 0.0
        %1334 = vmatprep.subr.mxu0 0.0
        %1335 = vmatpush1.msra.mxu0 0.0
        %1336 = vmatprep.mubr.f32.mxu0 0.0
        %1337 = vmatmul.mubr.f32.gmra.mrb[0].mxu0 %v1108
        %v1338 = vpop.f32.mrb[0].mxu0
        %v1339 = vadd.f32 %v172, %v1338
        %v1340 = vpop.f32.mrb[0].mxu0
        %1341 = vdwg.mxu0
        %v1343 = vrot.slane %v1339, 5
        %1344 = vrot.lane.b32.xlu0 %v1343, 96
        %v1345 = vpop.permute.xlu0 %1344
        %v1347 = vmul.f32 %v1261, %v1345
        %1349 = vrot.lane.b32.xlu0 %v1347, 64
        %v1350 = vpop.permute.xlu0 %1349
        %v1352 = vadd.f32 %v333, %v1350
        %v1353 = vtanh.pop %v1352
        %v1354 = vsub.f32 1.0, %v1271
        %1356 = vrot.lane.b32.xlu0 %v1353, 96
        %v1357 = vpop.permute.xlu0 %1356
        %v1359 = vmul.f32 %v1354, %v1357
        %v1360 = vrot.slane %v1103, 7
        %v1362 = vmul.f32 %v1271, %v1360
        %v1363 = vadd.f32 %v1359, %v1362
        %vm1364 = vcmask 257027
        %1365 = vst.msk [vmem:[#allocation2] sm:$0x8] %vm1364, %v1363
        %v1367 = vrot.slane %v1363, 3
        %v1368 = vsel %vm176, %v1367, 0
        %1370 = vmatprep.subr.mxu0 0.0
        %1371 = vmatpush1.msra.mxu0 %v150
        %1372 = vmatprep.subr.mxu0 0.0
        %1373 = vmatpush1.msra.mxu0 %v151
        %1374 = vmatprep.subr.mxu0 0.0
        %1375 = vmatpush1.msra.mxu0 %v152
        %1376 = vmatprep.subr.mxu0 0.0
        %1377 = vmatpush1.msra.mxu0 %v153
        %1378 = vmatprep.subr.mxu0 0.0
        %1379 = vmatpush1.msra.mxu0 0.0
        %1380 = vmatprep.subr.mxu0 0.0
        %1381 = vmatpush1.msra.mxu0 0.0
        %1382 = vmatprep.subr.mxu0 0.0
        %1383 = vmatpush1.msra.mxu0 0.0
        %1384 = vmatprep.subr.mxu0 0.0
        %1385 = vmatpush1.msra.mxu0 0.0
        %1386 = vmatprep.subr.mxu0 0.0
        %1387 = vmatpush1.msra.mxu0 0.0
        %1388 = vmatprep.subr.mxu0 0.0
        %1389 = vmatpush1.msra.mxu0 0.0
        %1390 = vmatprep.subr.mxu0 0.0
        %1391 = vmatpush1.msra.mxu0 0.0
        %1392 = vmatprep.subr.mxu0 0.0
        %1393 = vmatpush1.msra.mxu0 0.0
        %1394 = vmatprep.subr.mxu0 0.0
        %1395 = vmatpush1.msra.mxu0 0.0
        %1396 = vmatprep.subr.mxu0 0.0
        %1397 = vmatpush1.msra.mxu0 0.0
        %1398 = vmatprep.subr.mxu0 0.0
        %1399 = vmatpush1.msra.mxu0 0.0
        %1400 = vmatprep.subr.mxu0 0.0
        %1401 = vmatpush1.msra.mxu0 0.0
        %1402 = vmatprep.subr.mxu0 0.0
        %1403 = vmatpush1.msra.mxu0 0.0
        %1404 = vmatprep.subr.mxu0 0.0
        %1405 = vmatpush1.msra.mxu0 0.0
        %1406 = vmatprep.subr.mxu0 0.0
        %1407 = vmatpush1.msra.mxu0 0.0
        %1408 = vmatprep.subr.mxu0 0.0
        %1409 = vmatpush1.msra.mxu0 0.0
        %1410 = vmatprep.subr.mxu0 0.0
        %1411 = vmatpush1.msra.mxu0 0.0
        %1412 = vmatprep.subr.mxu0 0.0
        %1413 = vmatpush1.msra.mxu0 0.0
        %1414 = vmatprep.subr.mxu0 0.0
        %1415 = vmatpush1.msra.mxu0 0.0
        %1416 = vmatprep.subr.mxu0 0.0
        %1417 = vmatpush1.msra.mxu0 0.0
        %1418 = vmatprep.subr.mxu0 0.0
        %1419 = vmatpush1.msra.mxu0 0.0
        %1420 = vmatprep.subr.mxu0 0.0
        %1421 = vmatpush1.msra.mxu0 0.0
        %1422 = vmatprep.subr.mxu0 0.0
        %1423 = vmatpush1.msra.mxu0 0.0
        %1424 = vmatprep.subr.mxu0 0.0
        %1425 = vmatpush1.msra.mxu0 0.0
        %1426 = vmatprep.subr.mxu0 0.0
        %1427 = vmatpush1.msra.mxu0 0.0
        %1428 = vmatprep.subr.mxu0 0.0
        %1429 = vmatpush1.msra.mxu0 0.0
        %1430 = vmatprep.subr.mxu0 0.0
        %1431 = vmatpush1.msra.mxu0 0.0
        %1432 = vmatprep.subr.mxu0 0.0
        %1433 = vmatpush1.msra.mxu0 0.0
        %1434 = vmatprep.mubr.f32.mxu0 0.0
        %1435 = vmatmul.mubr.f32.gmra.mrb[0].mxu0 %v1368
        %v1436 = vpop.f32.mrb[0].mxu0
        %v1437 = vadd.f32 0.0, %v1436
        %v1438 = vpop.f32.mrb[0].mxu0
        %1439 = vdwg.mxu0
        %1440 = vmatprep.subr.mxu0 0.0
        %1441 = vmatpush1.msra.mxu0 %v154
        %1442 = vmatprep.subr.mxu0 0.0
        %1443 = vmatpush1.msra.mxu0 %v155
        %1444 = vmatprep.subr.mxu0 0.0
        %1445 = vmatpush1.msra.mxu0 %v156
        %1446 = vmatprep.subr.mxu0 0.0
        %1447 = vmatpush1.msra.mxu0 %v157
        %1448 = vmatprep.subr.mxu0 0.0
        %1449 = vmatpush1.msra.mxu0 0.0
        %1450 = vmatprep.subr.mxu0 0.0
        %1451 = vmatpush1.msra.mxu0 0.0
        %1452 = vmatprep.subr.mxu0 0.0
        %1453 = vmatpush1.msra.mxu0 0.0
        %1454 = vmatprep.subr.mxu0 0.0
        %1455 = vmatpush1.msra.mxu0 0.0
        %1456 = vmatprep.subr.mxu0 0.0
        %1457 = vmatpush1.msra.mxu0 0.0
        %1458 = vmatprep.subr.mxu0 0.0
        %1459 = vmatpush1.msra.mxu0 0.0
        %1460 = vmatprep.subr.mxu0 0.0
        %1461 = vmatpush1.msra.mxu0 0.0
        %1462 = vmatprep.subr.mxu0 0.0
        %1463 = vmatpush1.msra.mxu0 0.0
        %1464 = vmatprep.subr.mxu0 0.0
        %1465 = vmatpush1.msra.mxu0 0.0
        %1466 = vmatprep.subr.mxu0 0.0
        %1467 = vmatpush1.msra.mxu0 0.0
        %1468 = vmatprep.subr.mxu0 0.0
        %1469 = vmatpush1.msra.mxu0 0.0
        %1470 = vmatprep.subr.mxu0 0.0
        %1471 = vmatpush1.msra.mxu0 0.0
        %1472 = vmatprep.subr.mxu0 0.0
        %1473 = vmatpush1.msra.mxu0 0.0
        %1474 = vmatprep.subr.mxu0 0.0
        %1475 = vmatpush1.msra.mxu0 0.0
        %1476 = vmatprep.subr.mxu0 0.0
        %1477 = vmatpush1.msra.mxu0 0.0
        %1478 = vmatprep.subr.mxu0 0.0
        %1479 = vmatpush1.msra.mxu0 0.0
        %1480 = vmatprep.subr.mxu0 0.0
        %1481 = vmatpush1.msra.mxu0 0.0
        %1482 = vmatprep.subr.mxu0 0.0
        %1483 = vmatpush1.msra.mxu0 0.0
        %1484 = vmatprep.subr.mxu0 0.0
        %1485 = vmatpush1.msra.mxu0 0.0
        %1486 = vmatprep.subr.mxu0 0.0
        %1487 = vmatpush1.msra.mxu0 0.0
        %1488 = vmatprep.subr.mxu0 0.0
        %1489 = vmatpush1.msra.mxu0 0.0
        %1490 = vmatprep.subr.mxu0 0.0
        %1491 = vmatpush1.msra.mxu0 0.0
        %1492 = vmatprep.subr.mxu0 0.0
        %1493 = vmatpush1.msra.mxu0 0.0
        %1494 = vmatprep.subr.mxu0 0.0
        %1495 = vmatpush1.msra.mxu0 0.0
        %1496 = vmatprep.subr.mxu0 0.0
        %1497 = vmatpush1.msra.mxu0 0.0
        %1498 = vmatprep.subr.mxu0 0.0
        %1499 = vmatpush1.msra.mxu0 0.0
        %1500 = vmatprep.subr.mxu0 0.0
        %1501 = vmatpush1.msra.mxu0 0.0
        %1502 = vmatprep.subr.mxu0 0.0
        %1503 = vmatpush1.msra.mxu0 0.0
        %1504 = vmatprep.mubr.f32.mxu0 0.0
        %1505 = vmatmul.mubr.f32.gmra.mrb[0].mxu0 %v1368
        %v1506 = vpop.f32.mrb[0].mxu0
        %v1507 = vadd.f32 0.0, %v1506
        %v1508 = vpop.f32.mrb[0].mxu0
        %1509 = vdwg.mxu0
        %v1511 = vrot.slane %v1437, 4
        %1512 = vrot.lane.b32.xlu0 %v1511, 96
        %v1513 = vpop.permute.xlu0 %1512
        %v1515 = vadd.f32 %v331, %v1513
        %v1516 = vxor.u32 %v1515, 2147483648
        %v1517 = vmul.f32 %v1516, 1.442695
        %v1518 = vpow.pop %v1517
        %v1519 = vadd.f32 %v1518, 1.0
        %v1520 = vrcp.pop %v1519
        %v1521 = vmul.f32 1.0, %v1520
        %v1523 = vrot.slane %v1507, 4
        %v1525 = vadd.f32 %v333, %v1523
        %v1526 = vxor.u32 %v1525, 2147483648
        %v1527 = vmul.f32 %v1526, 1.442695
        %v1528 = vpow.pop %v1527
        %v1529 = vadd.f32 %v1528, 1.0
        %v1530 = vrcp.pop %v1529
        %v1531 = vmul.f32 1.0, %v1530
        %1532 = vmatprep.subr.mxu0 0.0
        %1533 = vmatpush1.msra.mxu0 %v158
        %1534 = vmatprep.subr.mxu0 0.0
        %1535 = vmatpush1.msra.mxu0 %v159
        %1536 = vmatprep.subr.mxu0 0.0
        %1537 = vmatpush1.msra.mxu0 %v160
        %1538 = vmatprep.subr.mxu0 0.0
        %1539 = vmatpush1.msra.mxu0 %v161
        %1540 = vmatprep.subr.mxu0 0.0
        %1541 = vmatpush1.msra.mxu0 0.0
        %1542 = vmatprep.subr.mxu0 0.0
        %1543 = vmatpush1.msra.mxu0 0.0
        %1544 = vmatprep.subr.mxu0 0.0
        %1545 = vmatpush1.msra.mxu0 0.0
        %1546 = vmatprep.subr.mxu0 0.0
        %1547 = vmatpush1.msra.mxu0 0.0
        %1548 = vmatprep.subr.mxu0 0.0
        %1549 = vmatpush1.msra.mxu0 0.0
        %1550 = vmatprep.subr.mxu0 0.0
        %1551 = vmatpush1.msra.mxu0 0.0
        %1552 = vmatprep.subr.mxu0 0.0
        %1553 = vmatpush1.msra.mxu0 0.0
        %1554 = vmatprep.subr.mxu0 0.0
        %1555 = vmatpush1.msra.mxu0 0.0
        %1556 = vmatprep.subr.mxu0 0.0
        %1557 = vmatpush1.msra.mxu0 0.0
        %1558 = vmatprep.subr.mxu0 0.0
        %1559 = vmatpush1.msra.mxu0 0.0
        %1560 = vmatprep.subr.mxu0 0.0
        %1561 = vmatpush1.msra.mxu0 0.0
        %1562 = vmatprep.subr.mxu0 0.0
        %1563 = vmatpush1.msra.mxu0 0.0
        %1564 = vmatprep.subr.mxu0 0.0
        %1565 = vmatpush1.msra.mxu0 0.0
        %1566 = vmatprep.subr.mxu0 0.0
        %1567 = vmatpush1.msra.mxu0 0.0
        %1568 = vmatprep.subr.mxu0 0.0
        %1569 = vmatpush1.msra.mxu0 0.0
        %1570 = vmatprep.subr.mxu0 0.0
        %1571 = vmatpush1.msra.mxu0 0.0
        %1572 = vmatprep.subr.mxu0 0.0
        %1573 = vmatpush1.msra.mxu0 0.0
        %1574 = vmatprep.subr.mxu0 0.0
        %1575 = vmatpush1.msra.mxu0 0.0
        %1576 = vmatprep.subr.mxu0 0.0
        %1577 = vmatpush1.msra.mxu0 0.0
        %1578 = vmatprep.subr.mxu0 0.0
        %1579 = vmatpush1.msra.mxu0 0.0
        %1580 = vmatprep.subr.mxu0 0.0
        %1581 = vmatpush1.msra.mxu0 0.0
        %1582 = vmatprep.subr.mxu0 0.0
        %1583 = vmatpush1.msra.mxu0 0.0
        %1584 = vmatprep.subr.mxu0 0.0
        %1585 = vmatpush1.msra.mxu0 0.0
        %1586 = vmatprep.subr.mxu0 0.0
        %1587 = vmatpush1.msra.mxu0 0.0
        %1588 = vmatprep.subr.mxu0 0.0
        %1589 = vmatpush1.msra.mxu0 0.0
        %1590 = vmatprep.subr.mxu0 0.0
        %1591 = vmatpush1.msra.mxu0 0.0
        %1592 = vmatprep.subr.mxu0 0.0
        %1593 = vmatpush1.msra.mxu0 0.0
        %1594 = vmatprep.subr.mxu0 0.0
        %1595 = vmatpush1.msra.mxu0 0.0
        %1596 = vmatprep.mubr.f32.mxu0 0.0
        %1597 = vmatmul.mubr.f32.gmra.mrb[0].mxu0 %v1368
        %v1598 = vpop.f32.mrb[0].mxu0
        %v1599 = vadd.f32 %v172, %v1598
        %v1600 = vpop.f32.mrb[0].mxu0
        %1601 = vdwg.mxu0
        %v1603 = vrot.slane %v1599, 4
        %1604 = vrot.lane.b32.xlu0 %v1603, 96
        %v1605 = vpop.permute.xlu0 %1604
        %v1607 = vmul.f32 %v1521, %v1605
        %1609 = vrot.lane.b32.xlu0 %v1607, 64
        %v1610 = vpop.permute.xlu0 %1609
        %v1612 = vadd.f32 %v333, %v1610
        %v1613 = vtanh.pop %v1612
        %v1614 = vsub.f32 1.0, %v1531
        %1616 = vrot.lane.b32.xlu0 %v1613, 96
        %v1617 = vpop.permute.xlu0 %1616
        %v1619 = vmul.f32 %v1614, %v1617
        %v1620 = vrot.slane %v1363, 7
        %v1622 = vmul.f32 %v1531, %v1620
        %v1623 = vadd.f32 %v1619, %v1622
        %vm1624 = vcmask 258052
        %1625 = vst.msk [vmem:[#allocation2] sm:$0x10] %vm1624, %v1623
        %v1627 = vrot.slane %v1623, 4
        %v1628 = vsel %vm176, %v1627, 0
        %1630 = vmatprep.subr.mxu0 0.0
        %1631 = vmatpush1.msra.mxu0 %v150
        %1632 = vmatprep.subr.mxu0 0.0
        %1633 = vmatpush1.msra.mxu0 %v151
        %1634 = vmatprep.subr.mxu0 0.0
        %1635 = vmatpush1.msra.mxu0 %v152
        %1636 = vmatprep.subr.mxu0 0.0
        %1637 = vmatpush1.msra.mxu0 %v153
        %1638 = vmatprep.subr.mxu0 0.0
        %1639 = vmatpush1.msra.mxu0 0.0
        %1640 = vmatprep.subr.mxu0 0.0
        %1641 = vmatpush1.msra.mxu0 0.0
        %1642 = vmatprep.subr.mxu0 0.0
        %1643 = vmatpush1.msra.mxu0 0.0
        %1644 = vmatprep.subr.mxu0 0.0
        %1645 = vmatpush1.msra.mxu0 0.0
        %1646 = vmatprep.subr.mxu0 0.0
        %1647 = vmatpush1.msra.mxu0 0.0
        %1648 = vmatprep.subr.mxu0 0.0
        %1649 = vmatpush1.msra.mxu0 0.0
        %1650 = vmatprep.subr.mxu0 0.0
        %1651 = vmatpush1.msra.mxu0 0.0
        %1652 = vmatprep.subr.mxu0 0.0
        %1653 = vmatpush1.msra.mxu0 0.0
        %1654 = vmatprep.subr.mxu0 0.0
        %1655 = vmatpush1.msra.mxu0 0.0
        %1656 = vmatprep.subr.mxu0 0.0
        %1657 = vmatpush1.msra.mxu0 0.0
        %1658 = vmatprep.subr.mxu0 0.0
        %1659 = vmatpush1.msra.mxu0 0.0
        %1660 = vmatprep.subr.mxu0 0.0
        %1661 = vmatpush1.msra.mxu0 0.0
        %1662 = vmatprep.subr.mxu0 0.0
        %1663 = vmatpush1.msra.mxu0 0.0
        %1664 = vmatprep.subr.mxu0 0.0
        %1665 = vmatpush1.msra.mxu0 0.0
        %1666 = vmatprep.subr.mxu0 0.0
        %1667 = vmatpush1.msra.mxu0 0.0
        %1668 = vmatprep.subr.mxu0 0.0
        %1669 = vmatpush1.msra.mxu0 0.0
        %1670 = vmatprep.subr.mxu0 0.0
        %1671 = vmatpush1.msra.mxu0 0.0
        %1672 = vmatprep.subr.mxu0 0.0
        %1673 = vmatpush1.msra.mxu0 0.0
        %1674 = vmatprep.subr.mxu0 0.0
        %1675 = vmatpush1.msra.mxu0 0.0
        %1676 = vmatprep.subr.mxu0 0.0
        %1677 = vmatpush1.msra.mxu0 0.0
        %1678 = vmatprep.subr.mxu0 0.0
        %1679 = vmatpush1.msra.mxu0 0.0
        %1680 = vmatprep.subr.mxu0 0.0
        %1681 = vmatpush1.msra.mxu0 0.0
        %1682 = vmatprep.subr.mxu0 0.0
        %1683 = vmatpush1.msra.mxu0 0.0
        %1684 = vmatprep.subr.mxu0 0.0
        %1685 = vmatpush1.msra.mxu0 0.0
        %1686 = vmatprep.subr.mxu0 0.0
        %1687 = vmatpush1.msra.mxu0 0.0
        %1688 = vmatprep.subr.mxu0 0.0
        %1689 = vmatpush1.msra.mxu0 0.0
        %1690 = vmatprep.subr.mxu0 0.0
        %1691 = vmatpush1.msra.mxu0 0.0
        %1692 = vmatprep.subr.mxu0 0.0
        %1693 = vmatpush1.msra.mxu0 0.0
        %1694 = vmatprep.mubr.f32.mxu0 0.0
        %1695 = vmatmul.mubr.f32.gmra.mrb[0].mxu0 %v1628
        %v1696 = vpop.f32.mrb[0].mxu0
        %v1697 = vadd.f32 0.0, %v1696
        %v1698 = vpop.f32.mrb[0].mxu0
        %1699 = vdwg.mxu0
        %1700 = vmatprep.subr.mxu0 0.0
        %1701 = vmatpush1.msra.mxu0 %v154
        %1702 = vmatprep.subr.mxu0 0.0
        %1703 = vmatpush1.msra.mxu0 %v155
        %1704 = vmatprep.subr.mxu0 0.0
        %1705 = vmatpush1.msra.mxu0 %v156
        %1706 = vmatprep.subr.mxu0 0.0
        %1707 = vmatpush1.msra.mxu0 %v157
        %1708 = vmatprep.subr.mxu0 0.0
        %1709 = vmatpush1.msra.mxu0 0.0
        %1710 = vmatprep.subr.mxu0 0.0
        %1711 = vmatpush1.msra.mxu0 0.0
        %1712 = vmatprep.subr.mxu0 0.0
        %1713 = vmatpush1.msra.mxu0 0.0
        %1714 = vmatprep.subr.mxu0 0.0
        %1715 = vmatpush1.msra.mxu0 0.0
        %1716 = vmatprep.subr.mxu0 0.0
        %1717 = vmatpush1.msra.mxu0 0.0
        %1718 = vmatprep.subr.mxu0 0.0
        %1719 = vmatpush1.msra.mxu0 0.0
        %1720 = vmatprep.subr.mxu0 0.0
        %1721 = vmatpush1.msra.mxu0 0.0
        %1722 = vmatprep.subr.mxu0 0.0
        %1723 = vmatpush1.msra.mxu0 0.0
        %1724 = vmatprep.subr.mxu0 0.0
        %1725 = vmatpush1.msra.mxu0 0.0
        %1726 = vmatprep.subr.mxu0 0.0
        %1727 = vmatpush1.msra.mxu0 0.0
        %1728 = vmatprep.subr.mxu0 0.0
        %1729 = vmatpush1.msra.mxu0 0.0
        %1730 = vmatprep.subr.mxu0 0.0
        %1731 = vmatpush1.msra.mxu0 0.0
        %1732 = vmatprep.subr.mxu0 0.0
        %1733 = vmatpush1.msra.mxu0 0.0
        %1734 = vmatprep.subr.mxu0 0.0
        %1735 = vmatpush1.msra.mxu0 0.0
        %1736 = vmatprep.subr.mxu0 0.0
        %1737 = vmatpush1.msra.mxu0 0.0
        %1738 = vmatprep.subr.mxu0 0.0
        %1739 = vmatpush1.msra.mxu0 0.0
        %1740 = vmatprep.subr.mxu0 0.0
        %1741 = vmatpush1.msra.mxu0 0.0
        %1742 = vmatprep.subr.mxu0 0.0
        %1743 = vmatpush1.msra.mxu0 0.0
        %1744 = vmatprep.subr.mxu0 0.0
        %1745 = vmatpush1.msra.mxu0 0.0
        %1746 = vmatprep.subr.mxu0 0.0
        %1747 = vmatpush1.msra.mxu0 0.0
        %1748 = vmatprep.subr.mxu0 0.0
        %1749 = vmatpush1.msra.mxu0 0.0
        %1750 = vmatprep.subr.mxu0 0.0
        %1751 = vmatpush1.msra.mxu0 0.0
        %1752 = vmatprep.subr.mxu0 0.0
        %1753 = vmatpush1.msra.mxu0 0.0
        %1754 = vmatprep.subr.mxu0 0.0
        %1755 = vmatpush1.msra.mxu0 0.0
        %1756 = vmatprep.subr.mxu0 0.0
        %1757 = vmatpush1.msra.mxu0 0.0
        %1758 = vmatprep.subr.mxu0 0.0
        %1759 = vmatpush1.msra.mxu0 0.0
        %1760 = vmatprep.subr.mxu0 0.0
        %1761 = vmatpush1.msra.mxu0 0.0
        %1762 = vmatprep.subr.mxu0 0.0
        %1763 = vmatpush1.msra.mxu0 0.0
        %1764 = vmatprep.mubr.f32.mxu0 0.0
        %1765 = vmatmul.mubr.f32.gmra.mrb[0].mxu0 %v1628
        %v1766 = vpop.f32.mrb[0].mxu0
        %v1767 = vadd.f32 0.0, %v1766
        %v1768 = vpop.f32.mrb[0].mxu0
        %1769 = vdwg.mxu0
        %v1771 = vrot.slane %v1697, 3
        %1772 = vrot.lane.b32.xlu0 %v1771, 96
        %v1773 = vpop.permute.xlu0 %1772
        %v1775 = vadd.f32 %v331, %v1773
        %v1776 = vxor.u32 %v1775, 2147483648
        %v1777 = vmul.f32 %v1776, 1.442695
        %v1778 = vpow.pop %v1777
        %v1779 = vadd.f32 %v1778, 1.0
        %v1780 = vrcp.pop %v1779
        %v1781 = vmul.f32 1.0, %v1780
        %v1783 = vrot.slane %v1767, 3
        %v1785 = vadd.f32 %v333, %v1783
        %v1786 = vxor.u32 %v1785, 2147483648
        %v1787 = vmul.f32 %v1786, 1.442695
        %v1788 = vpow.pop %v1787
        %v1789 = vadd.f32 %v1788, 1.0
        %v1790 = vrcp.pop %v1789
        %v1791 = vmul.f32 1.0, %v1790
        %1792 = vmatprep.subr.mxu0 0.0
        %1793 = vmatpush1.msra.mxu0 %v158
        %1794 = vmatprep.subr.mxu0 0.0
        %1795 = vmatpush1.msra.mxu0 %v159
        %1796 = vmatprep.subr.mxu0 0.0
        %1797 = vmatpush1.msra.mxu0 %v160
        %1798 = vmatprep.subr.mxu0 0.0
        %1799 = vmatpush1.msra.mxu0 %v161
        %1800 = vmatprep.subr.mxu0 0.0
        %1801 = vmatpush1.msra.mxu0 0.0
        %1802 = vmatprep.subr.mxu0 0.0
        %1803 = vmatpush1.msra.mxu0 0.0
        %1804 = vmatprep.subr.mxu0 0.0
        %1805 = vmatpush1.msra.mxu0 0.0
        %1806 = vmatprep.subr.mxu0 0.0
        %1807 = vmatpush1.msra.mxu0 0.0
        %1808 = vmatprep.subr.mxu0 0.0
        %1809 = vmatpush1.msra.mxu0 0.0
        %1810 = vmatprep.subr.mxu0 0.0
        %1811 = vmatpush1.msra.mxu0 0.0
        %1812 = vmatprep.subr.mxu0 0.0
        %1813 = vmatpush1.msra.mxu0 0.0
        %1814 = vmatprep.subr.mxu0 0.0
        %1815 = vmatpush1.msra.mxu0 0.0
        %1816 = vmatprep.subr.mxu0 0.0
        %1817 = vmatpush1.msra.mxu0 0.0
        %1818 = vmatprep.subr.mxu0 0.0
        %1819 = vmatpush1.msra.mxu0 0.0
        %1820 = vmatprep.subr.mxu0 0.0
        %1821 = vmatpush1.msra.mxu0 0.0
        %1822 = vmatprep.subr.mxu0 0.0
        %1823 = vmatpush1.msra.mxu0 0.0
        %1824 = vmatprep.subr.mxu0 0.0
        %1825 = vmatpush1.msra.mxu0 0.0
        %1826 = vmatprep.subr.mxu0 0.0
        %1827 = vmatpush1.msra.mxu0 0.0
        %1828 = vmatprep.subr.mxu0 0.0
        %1829 = vmatpush1.msra.mxu0 0.0
        %1830 = vmatprep.subr.mxu0 0.0
        %1831 = vmatpush1.msra.mxu0 0.0
        %1832 = vmatprep.subr.mxu0 0.0
        %1833 = vmatpush1.msra.mxu0 0.0
        %1834 = vmatprep.subr.mxu0 0.0
        %1835 = vmatpush1.msra.mxu0 0.0
        %1836 = vmatprep.subr.mxu0 0.0
        %1837 = vmatpush1.msra.mxu0 0.0
        %1838 = vmatprep.subr.mxu0 0.0
        %1839 = vmatpush1.msra.mxu0 0.0
        %1840 = vmatprep.subr.mxu0 0.0
        %1841 = vmatpush1.msra.mxu0 0.0
        %1842 = vmatprep.subr.mxu0 0.0
        %1843 = vmatpush1.msra.mxu0 0.0
        %1844 = vmatprep.subr.mxu0 0.0
        %1845 = vmatpush1.msra.mxu0 0.0
        %1846 = vmatprep.subr.mxu0 0.0
        %1847 = vmatpush1.msra.mxu0 0.0
        %1848 = vmatprep.subr.mxu0 0.0
        %1849 = vmatpush1.msra.mxu0 0.0
        %1850 = vmatprep.subr.mxu0 0.0
        %1851 = vmatpush1.msra.mxu0 0.0
        %1852 = vmatprep.subr.mxu0 0.0
        %1853 = vmatpush1.msra.mxu0 0.0
        %1854 = vmatprep.subr.mxu0 0.0
        %1855 = vmatpush1.msra.mxu0 0.0
        %1856 = vmatprep.mubr.f32.mxu0 0.0
        %1857 = vmatmul.mubr.f32.gmra.mrb[0].mxu0 %v1628
        %v1858 = vpop.f32.mrb[0].mxu0
        %v1859 = vadd.f32 %v172, %v1858
        %v1860 = vpop.f32.mrb[0].mxu0
        %1861 = vdwg.mxu0
        %v1863 = vrot.slane %v1859, 3
        %1864 = vrot.lane.b32.xlu0 %v1863, 96
        %v1865 = vpop.permute.xlu0 %1864
        %v1867 = vmul.f32 %v1781, %v1865
        %1869 = vrot.lane.b32.xlu0 %v1867, 64
        %v1870 = vpop.permute.xlu0 %1869
        %v1872 = vadd.f32 %v333, %v1870
        %v1873 = vtanh.pop %v1872
        %v1874 = vsub.f32 1.0, %v1791
        %1876 = vrot.lane.b32.xlu0 %v1873, 96
        %v1877 = vpop.permute.xlu0 %1876
        %v1879 = vmul.f32 %v1874, %v1877
        %v1880 = vrot.slane %v1623, 7
        %v1882 = vmul.f32 %v1791, %v1880
        %v1883 = vadd.f32 %v1879, %v1882
        %vm1884 = vcmask 259077
        %1885 = vst.msk [vmem:[#allocation2] sm:$0x20] %vm1884, %v1883
        %v1886 = vld [vmem:[#allocation2] sm:$0x3f]
        %v1888 = vsel %vm176, %v1886, 0
        %1890 = vmatprep.subr.mxu0 0.0
        %1891 = vmatpush1.msra.mxu0 %v162
        %1892 = vmatprep.subr.mxu0 0.0
        %1893 = vmatpush1.msra.mxu0 %v163
        %1894 = vmatprep.subr.mxu0 0.0
        %1895 = vmatpush1.msra.mxu0 %v164
        %1896 = vmatprep.subr.mxu0 0.0
        %1897 = vmatpush1.msra.mxu0 %v165
        %1898 = vmatprep.subr.mxu0 0.0
        %1899 = vmatpush1.msra.mxu0 0.0
        %1900 = vmatprep.subr.mxu0 0.0
        %1901 = vmatpush1.msra.mxu0 0.0
        %1902 = vmatprep.subr.mxu0 0.0
        %1903 = vmatpush1.msra.mxu0 0.0
        %1904 = vmatprep.subr.mxu0 0.0
        %1905 = vmatpush1.msra.mxu0 0.0
        %1906 = vmatprep.subr.mxu0 0.0
        %1907 = vmatpush1.msra.mxu0 0.0
        %1908 = vmatprep.subr.mxu0 0.0
        %1909 = vmatpush1.msra.mxu0 0.0
        %1910 = vmatprep.subr.mxu0 0.0
        %1911 = vmatpush1.msra.mxu0 0.0
        %1912 = vmatprep.subr.mxu0 0.0
        %1913 = vmatpush1.msra.mxu0 0.0
        %1914 = vmatprep.subr.mxu0 0.0
        %1915 = vmatpush1.msra.mxu0 0.0
        %1916 = vmatprep.subr.mxu0 0.0
        %1917 = vmatpush1.msra.mxu0 0.0
        %1918 = vmatprep.subr.mxu0 0.0
        %1919 = vmatpush1.msra.mxu0 0.0
        %1920 = vmatprep.subr.mxu0 0.0
        %1921 = vmatpush1.msra.mxu0 0.0
        %1922 = vmatprep.subr.mxu0 0.0
        %1923 = vmatpush1.msra.mxu0 0.0
        %1924 = vmatprep.subr.mxu0 0.0
        %1925 = vmatpush1.msra.mxu0 0.0
        %1926 = vmatprep.subr.mxu0 0.0
        %1927 = vmatpush1.msra.mxu0 0.0
        %1928 = vmatprep.subr.mxu0 0.0
        %1929 = vmatpush1.msra.mxu0 0.0
        %1930 = vmatprep.subr.mxu0 0.0
        %1931 = vmatpush1.msra.mxu0 0.0
        %1932 = vmatprep.subr.mxu0 0.0
        %1933 = vmatpush1.msra.mxu0 0.0
        %1934 = vmatprep.subr.mxu0 0.0
        %1935 = vmatpush1.msra.mxu0 0.0
        %1936 = vmatprep.subr.mxu0 0.0
        %1937 = vmatpush1.msra.mxu0 0.0
        %1938 = vmatprep.subr.mxu0 0.0
        %1939 = vmatpush1.msra.mxu0 0.0
        %1940 = vmatprep.subr.mxu0 0.0
        %1941 = vmatpush1.msra.mxu0 0.0
        %1942 = vmatprep.subr.mxu0 0.0
        %1943 = vmatpush1.msra.mxu0 0.0
        %1944 = vmatprep.subr.mxu0 0.0
        %1945 = vmatpush1.msra.mxu0 0.0
        %1946 = vmatprep.subr.mxu0 0.0
        %1947 = vmatpush1.msra.mxu0 0.0
        %1948 = vmatprep.subr.mxu0 0.0
        %1949 = vmatpush1.msra.mxu0 0.0
        %1950 = vmatprep.subr.mxu0 0.0
        %1951 = vmatpush1.msra.mxu0 0.0
        %1952 = vmatprep.subr.mxu0 0.0
        %1953 = vmatpush1.msra.mxu0 0.0
        %1954 = vmatprep.mubr.f32.mxu0 0.0
        %1955 = vmatmul.mubr.f32.gmra.mrb[0].mxu0 %v1888
        %v1956 = vpop.f32.mrb[0].mxu0
        %v1957 = vadd.f32 %v173, %v1956
        %v1958 = vpop.f32.mrb[0].mxu0
        %1959 = vdwg.mxu0
        %v1960 = vtanh.pop %v1957
        %v1961 = vmul.f32 %v1960, %v247
        %vm1962 = vcmask 259072
        %v1963 = vsel %vm1962, %v1961, 0.0
        %v1964 = vrot.slane %v1963, 4
        %v1965 = vadd.f32 %v1963, %v1964
        %v1966 = vrot.slane %v1965, 2
        %v1967 = vadd.f32 %v1965, %v1966
        %v1968 = vrot.slane %v1967, 1
        %v1969 = vadd.f32 %v1967, %v1968
        %v1971 = vsel %vm176, %v1969, 0
        %1973 = vmatprep.subr.mxu0 0.0
        %1974 = vmatpush1.msra.mxu0 %v166
        %1975 = vmatprep.subr.mxu0 0.0
        %1976 = vmatpush1.msra.mxu0 %v167
        %1977 = vmatprep.subr.mxu0 0.0
        %1978 = vmatpush1.msra.mxu0 %v168
        %1979 = vmatprep.subr.mxu0 0.0
        %1980 = vmatpush1.msra.mxu0 %v169
        %1981 = vmatprep.subr.mxu0 0.0
        %1982 = vmatpush1.msra.mxu0 0.0
        %1983 = vmatprep.subr.mxu0 0.0
        %1984 = vmatpush1.msra.mxu0 0.0
        %1985 = vmatprep.subr.mxu0 0.0
        %1986 = vmatpush1.msra.mxu0 0.0
        %1987 = vmatprep.subr.mxu0 0.0
        %1988 = vmatpush1.msra.mxu0 0.0
        %1989 = vmatprep.subr.mxu0 0.0
        %1990 = vmatpush1.msra.mxu0 0.0
        %1991 = vmatprep.subr.mxu0 0.0
        %1992 = vmatpush1.msra.mxu0 0.0
        %1993 = vmatprep.subr.mxu0 0.0
        %1994 = vmatpush1.msra.mxu0 0.0
        %1995 = vmatprep.subr.mxu0 0.0
        %1996 = vmatpush1.msra.mxu0 0.0
        %1997 = vmatprep.subr.mxu0 0.0
        %1998 = vmatpush1.msra.mxu0 0.0
        %1999 = vmatprep.subr.mxu0 0.0
        %2000 = vmatpush1.msra.mxu0 0.0
        %2001 = vmatprep.subr.mxu0 0.0
        %2002 = vmatpush1.msra.mxu0 0.0
        %2003 = vmatprep.subr.mxu0 0.0
        %2004 = vmatpush1.msra.mxu0 0.0
        %2005 = vmatprep.subr.mxu0 0.0
        %2006 = vmatpush1.msra.mxu0 0.0
        %2007 = vmatprep.subr.mxu0 0.0
        %2008 = vmatpush1.msra.mxu0 0.0
        %2009 = vmatprep.subr.mxu0 0.0
        %2010 = vmatpush1.msra.mxu0 0.0
        %2011 = vmatprep.subr.mxu0 0.0
        %2012 = vmatpush1.msra.mxu0 0.0
        %2013 = vmatprep.subr.mxu0 0.0
        %2014 = vmatpush1.msra.mxu0 0.0
        %2015 = vmatprep.subr.mxu0 0.0
        %2016 = vmatpush1.msra.mxu0 0.0
        %2017 = vmatprep.subr.mxu0 0.0
        %2018 = vmatpush1.msra.mxu0 0.0
        %2019 = vmatprep.subr.mxu0 0.0
        %2020 = vmatpush1.msra.mxu0 0.0
        %2021 = vmatprep.subr.mxu0 0.0
        %2022 = vmatpush1.msra.mxu0 0.0
        %2023 = vmatprep.subr.mxu0 0.0
        %2024 = vmatpush1.msra.mxu0 0.0
        %2025 = vmatprep.subr.mxu0 0.0
        %2026 = vmatpush1.msra.mxu0 0.0
        %2027 = vmatprep.subr.mxu0 0.0
        %2028 = vmatpush1.msra.mxu0 0.0
        %2029 = vmatprep.subr.mxu0 0.0
        %2030 = vmatpush1.msra.mxu0 0.0
        %2031 = vmatprep.subr.mxu0 0.0
        %2032 = vmatpush1.msra.mxu0 0.0
        %2033 = vmatprep.subr.mxu0 0.0
        %2034 = vmatpush1.msra.mxu0 0.0
        %2035 = vmatprep.subr.mxu0 0.0
        %2036 = vmatpush1.msra.mxu0 0.0
        %2037 = vmatprep.mubr.f32.mxu0 0.0
        %2038 = vmatmul.mubr.f32.gmra.mrb[0].mxu0 %v1971
        %v2039 = vpop.f32.mrb[0].mxu0
        %v2040 = vadd.f32 %v174, %v2039
        %v2041 = vpop.f32.mrb[0].mxu0
        %2042 = vdwg.mxu0
        %2043 = vst [vmem:[%s133] sm:$0x1] %v2040
        %s2044 = sand.u32 %s71, 1
        %s2045 = scalar_lea.sflag [#allocation4], %s2044
        %s2046 = sand.u32 %s71, 1
        %s2047 = scalar_lea.vmem [#allocation3], %s2046
        // Predicated region
        $region29: #{tpu_custom_call.1} parent=27 // pred_check
          %p2048 = pneg %p81
        $region30: #{tpu_custom_call.1} parent=27 // pred_check_branch
          %2050 = sbr.rel (%p2048) target = $region32
        $region31: #{tpu_custom_call.1} parent=27 // pred_region
          %s2052 = ssub.s32 16, 16
          %2053 = vsyncadd %s2045, %s2052
          %s2054 = smul.addr %s16, 16
          %s2055 = scalar_lea.hbm %s2, %s2054
          %s2057 = sshll.u32 %s2047, 4
          %s2058 = int_to_ptr.vmem [resolvable:$true] %s2057
          %2060 = dma.vmem_to_hbm [thread:$0]  %s2058, 16, %s2055, %s2045
        $region32: #{tpu_custom_call.1} parent=27 // pred_fallthru
          _
      $region28: #{tpu_custom_call.1} parent=5 // pred_fallthru
        _
      %p2061 = scmp.le.s32.totalorder 2, %s11
      // Predicated region
      $region33: #{tpu_custom_call.1} parent=5 // pred_check
        %p2062 = pneg %p2061
      $region34: #{tpu_custom_call.1} parent=5 // pred_check_branch
        %2064 = sbr.rel (%p2062) target = $region36
      $region35: #{tpu_custom_call.1} parent=5 // pred_region
        %s2065 = ssub.s32 %s11, 2
        // Predicated region
        $region37: #{tpu_custom_call.1} parent=35 // pred_check
          %p2066 = pneg %p87
        $region38: #{tpu_custom_call.1} parent=35 // pred_check_branch
          %2068 = sbr.rel (%p2066) target = $region40
        $region39: #{tpu_custom_call.1} parent=35 // pred_region
          %s2069 = sand.u32 %s72, 1
          %s2070 = scalar_lea.sflag [#allocation4], %s2069
          %s2071 = sand.u32 %s72, 1
          %s2072 = scalar_lea.vmem [#allocation3], %s2071
          %2073 = dma.done %s2070, 16
        $region40: #{tpu_custom_call.1} parent=35 // pred_fallthru
          _
      $region36: #{tpu_custom_call.1} parent=5 // pred_fallthru
        _
    $region6: #{tpu_custom_call.1} parent=1 // loop_footer
      %s15 = sadd.s32 1, %s11
    $region7: #{tpu_custom_call.1} parent=1 // loop_footer_branch
      %10 = sbr.rel target = $region3
    $region8: #{tpu_custom_call.1} parent=1 // loop_exit
      _
    %2074 = vsyncpa [#allocation4], 1
    %s2075 = scalar_lea.sflag [#allocation4], 1
    %2076 = vsyncpa %s2075, 1

</llo_original>
